<compile_context>
chip_gen: v5e
topology: v5e:2x2
jax: 0.10.0
libtpu: 0.0.40
codegen_flags: <defaults>
</compile_context>

<pallas_src>
import jax
import jax.numpy as jnp
from jax.experimental import pallas as pl
from jax.experimental.pallas import tpu as pltpu


# ----------------------------------------------------------------------------
# small helpers
# ----------------------------------------------------------------------------
def _round_up(x, m):
    return ((x + m - 1) // m) * m


def _full_spec(shape):
    n = len(shape)
    return pl.BlockSpec(shape, lambda *_: (0,) * n)


# ----------------------------------------------------------------------------
# Kernels
# ----------------------------------------------------------------------------
def encoder_kernel(x_ref, w1_ref, w2_ref, b2_ref, o_ref):
    # x_ref:  (B, Cp, H*W)  NCHW image, spatial flattened, channels padded to 8
    # w1_ref: (Cp, 2048)    backbone stand-in projection (bf16)
    # w2_ref: (2048, E)     encoder.l2 weight, transposed (bf16)
    # b2_ref: (1, E)        encoder.l2 bias (f32)
    pooled = jnp.mean(x_ref[...], axis=-1)                       # (B, Cp) f32
    feat = jnp.dot(pooled.astype(jnp.bfloat16), w1_ref[...],
                   preferred_element_type=jnp.float32)           # (B, 2048)
    feat = jnp.maximum(feat, 0.0)                                # encoder ReLU
    # TODO(synk): Dropout(0.5) -> identity (eval mode)
    o_ref[...] = (jnp.dot(feat.astype(jnp.bfloat16), w2_ref[...],
                          preferred_element_type=jnp.float32)
                  + b2_ref[...]).astype(o_ref.dtype)


def matmul_bias_kernel(x_ref, w_ref, b_ref, o_ref):
    # x_ref: (tn, K) f32, w_ref: (K, tv) bf16, b_ref: (1, tv) f32
    x = x_ref[...].astype(jnp.bfloat16)
    o_ref[...] = (jnp.dot(x, w_ref[...], preferred_element_type=jnp.float32)
                  + b_ref[...]).astype(o_ref.dtype)


def lstm_recurrence_kernel(xp_ref, whh_ref, out_ref, h_scr, c_scr):
    # grid = (T,), sequential ("arbitrary") recurrence.
    # xp_ref:  (1, B, 4H)  precomputed x @ W_ih + b_ih + b_hh for this timestep
    # whh_ref: (H, 4H)     W_hh^T (bf16), block index constant -> stays in VMEM
    # out_ref: (1, B, H)
    # h_scr/c_scr: (B, H)  f32 VMEM scratch, persists across grid steps
    t = pl.program_id(0)
    H = whh_ref.shape[0]

    @pl.when(t == 0)
    def _():
        h_scr[...] = jnp.zeros_like(h_scr)
        c_scr[...] = jnp.zeros_like(c_scr)

    gates = xp_ref[0] + jnp.dot(h_scr[...].astype(jnp.bfloat16), whh_ref[...],
                                preferred_element_type=jnp.float32)  # (B, 4H)
    # PyTorch gate packing: i, f, g, o  (lane-aligned slices when H % 128 == 0)
    i_g = jax.nn.sigmoid(gates[:, 0 * H:1 * H])
    f_g = jax.nn.sigmoid(gates[:, 1 * H:2 * H])
    g_g = jnp.tanh(gates[:, 2 * H:3 * H])
    o_g = jax.nn.sigmoid(gates[:, 3 * H:4 * H])
    c_new = f_g * c_scr[...] + i_g * g_g
    h_new = o_g * jnp.tanh(c_new)
    c_scr[...] = c_new
    h_scr[...] = h_new
    out_ref[0] = h_new.astype(out_ref.dtype)


# ----------------------------------------------------------------------------
# Wrappers
# ----------------------------------------------------------------------------
def encoder_forward(x_img, w1, w2, b2):
    # x_img already batch-padded to a multiple of 8.
    B, C, IH, IW = x_img.shape
    Cp = _round_up(C, 8)
    x = x_img.reshape(B, C, IH * IW).astype(jnp.float32)
    if Cp != C:                                   # zero-pad channels (exact)
        x = jnp.pad(x, ((0, 0), (0, Cp - C), (0, 0)))
        w1 = jnp.pad(w1, ((0, Cp - C), (0, 0)))
    E = w2.shape[1]
    return pl.pallas_call(
        encoder_kernel,
        out_shape=jax.ShapeDtypeStruct((B, E), jnp.float32),
        in_specs=[_full_spec(x.shape), _full_spec(w1.shape),
                  _full_spec(w2.shape), _full_spec(b2.shape)],
        out_specs=_full_spec((B, E)),
    )(x, w1.astype(jnp.bfloat16), w2.astype(jnp.bfloat16), b2)


def matmul_bias(x2d, w_t, b, *, tn=256, tv=256):
    # Tiled (N, V) matmul + bias: x2d (N, K) @ w_t (K, V) + b (1, V).
    # N padded to a multiple of 8 (sublane), V padded to a multiple of 128
    # (lane); K kept as a single full block (small for this model).
    N, K = x2d.shape
    V = w_t.shape[1]
    tn = min(tn, _round_up(N, 8))
    tv = min(tv, _round_up(V, 128))
    Np = _round_up(N, tn)
    Vp = _round_up(V, tv)
    if Np != N:
        x2d = jnp.pad(x2d, ((0, Np - N), (0, 0)))
    if Vp != V:
        w_t = jnp.pad(w_t, ((0, 0), (0, Vp - V)))
        b = jnp.pad(b, ((0, 0), (0, Vp - V)))
    out = pl.pallas_call(
        matmul_bias_kernel,
        out_shape=jax.ShapeDtypeStruct((Np, Vp), jnp.float32),
        grid=(Np // tn, Vp // tv),
        in_specs=[pl.BlockSpec((tn, K), lambda i, j: (i, 0)),
                  pl.BlockSpec((K, tv), lambda i, j: (0, j)),
                  pl.BlockSpec((1, tv), lambda i, j: (0, j))],
        out_specs=pl.BlockSpec((tn, tv), lambda i, j: (i, j)),
        compiler_params=pltpu.CompilerParams(
            dimension_semantics=("parallel", "parallel")),
    )(x2d, w_t.astype(jnp.bfloat16), b)
    return out[:N, :V]


def lstm_layer(xproj_tbg, whh_t):
    # xproj_tbg: (T, B, 4H) time-major, already contains x@W_ih + b_ih + b_hh
    # whh_t:     (H, 4H)
    T, B, G = xproj_tbg.shape
    H = whh_t.shape[0]
    return pl.pallas_call(
        lstm_recurrence_kernel,
        out_shape=jax.ShapeDtypeStruct((T, B, H), jnp.float32),
        grid=(T,),
        in_specs=[pl.BlockSpec((1, B, G), lambda t: (t, 0, 0)),
                  pl.BlockSpec((H, G), lambda t: (0, 0))],
        out_specs=pl.BlockSpec((1, B, H), lambda t: (t, 0, 0)),
        scratch_shapes=[pltpu.VMEM((B, H), jnp.float32),   # h
                        pltpu.VMEM((B, H), jnp.float32)],  # c
        compiler_params=pltpu.CompilerParams(
            dimension_semantics=("arbitrary",)),
    )(xproj_tbg, whh_t.astype(jnp.bfloat16))


def our_model_forward(params, x_img, y_tokens):
    B = x_img.shape[0]
    Bp = _round_up(B, 8)                       # sublane-pad the batch
    if Bp != B:
        x_img = jnp.pad(x_img, ((0, Bp - B), (0, 0), (0, 0), (0, 0)))
        y_tokens = jnp.pad(y_tokens, ((0, Bp - B), (0, 0)))

    # ---- encoder ----
    features = encoder_forward(x_img, params["enc_w1"],
                               params["enc_w2"], params["enc_b2"])   # (Bp, E)

    # ---- decoder (time-major end-to-end) ----
    # embedding lookup (gather) in glue JAX; padding_idx=0 row is zeroed.
    emb = jnp.take(params["embedding"], y_tokens.T, axis=0)          # (T, Bp, E)
    seq = jnp.concatenate([features[None], emb], axis=0)             # (T+1, Bp, E)

    h = seq
    for layer in params["lstm"]:
        Tp1, _, in_dim = h.shape
        G = layer["wih_t"].shape[1]
        # hoisted time-independent gate half: one big MXU matmul for all steps
        xproj = matmul_bias(h.reshape(Tp1 * Bp, in_dim),
                            layer["wih_t"], layer["b"])              # (Tp1*Bp, 4H)
        h = lstm_layer(xproj.reshape(Tp1, Bp, G), layer["whh_t"])    # (Tp1, Bp, H)

    # TODO(synk): Dropout(0.5) -> identity (eval mode)
    Tp1, _, H = h.shape
    V = params["lin_w_t"].shape[1]
    logits = matmul_bias(h.reshape(Tp1 * Bp, H),
                         params["lin_w_t"], params["lin_b"])         # (Tp1*Bp, V)
    logits = logits.reshape(Tp1, Bp, V)[:, :B]                       # drop batch pad
    return jnp.transpose(logits, (1, 0, 2))                          # (B, T+1, V)


# ----------------------------------------------------------------------------
# Deterministic parameter construction
# ----------------------------------------------------------------------------
def make_params(key, *, img_c, embed_size, hidden_size, vocab_size, n_layers):
    ks = jax.random.split(key, 6 + 4 * n_layers)
    scale = 0.05

    # backbone stand-in: global-avg-pool + (C, 2048) projection
    # (equivalent to the previous repeat-expanded (C*H*W, 2048) weight)
    enc_w1 = scale * jax.random.normal(ks[0], (img_c, 2048), jnp.float32)

    # encoder.l2: Linear(2048, embed_size)  (stored transposed)
    enc_w2 = scale * jax.random.normal(ks[1], (2048, embed_size), jnp.float32)
    enc_b2 = scale * jax.random.normal(ks[2], (1, embed_size), jnp.float32)

    # decoder.embedding: (vocab, embed), padding_idx=0 -> row 0 zeroed
    embedding = scale * jax.random.normal(ks[3], (vocab_size, embed_size),
                                          jnp.float32)
    embedding = embedding.at[0].set(0.0)

    # decoder.lstm: per layer W_ih (4H, in), W_hh (4H, H), b_ih + b_hh
    # PyTorch gate packing order: i, f, g, o
    lstm = []
    for l in range(n_layers):
        in_dim = embed_size if l == 0 else hidden_size
        k0, k1, k2, k3 = ks[4 + 4 * l: 8 + 4 * l]
        wih = scale * jax.random.normal(k0, (4 * hidden_size, in_dim), jnp.float32)
        whh = scale * jax.random.normal(k1, (4 * hidden_size, hidden_size), jnp.float32)
        b_ih = scale * jax.random.normal(k2, (4 * hidden_size,), jnp.float32)
        b_hh = scale * jax.random.normal(k3, (4 * hidden_size,), jnp.float32)
        lstm.append({"wih_t": wih.T,                       # (in, 4H)
                     "whh_t": whh.T,                       # (H, 4H)
                     "b": (b_ih + b_hh)[None, :]})         # (1, 4H)

    # decoder.linear: Linear(hidden, vocab)  (stored transposed)
    lin_w = scale * jax.random.normal(ks[4 + 4 * n_layers],
                                      (vocab_size, hidden_size), jnp.float32)
    lin_b = scale * jax.random.normal(ks[5 + 4 * n_layers],
                                      (1, vocab_size), jnp.float32)

    return {"enc_w1": enc_w1, "enc_w2": enc_w2, "enc_b2": enc_b2,
            "embedding": embedding, "lstm": lstm,
            "lin_w_t": lin_w.T, "lin_b": lin_b}


# ----------------------------------------------------------------------------
if __name__ == "__main__":
    B, C, IMG = 2, 3, 16                      # small NCHW images
    EMBED, HIDDEN, VOCAB, NLAYERS = 128, 128, 256, 2   # lane-aligned dims
    SEQ = 8

    key = jax.random.PRNGKey(0)
    k_img, k_tok, k_par = jax.random.split(key, 3)

    x = jax.random.normal(k_img, (B, C, IMG, IMG), jnp.float32)      # images NCHW
    y = jax.random.randint(k_tok, (B, SEQ), 0, VOCAB, jnp.int32)     # token ids

    params = make_params(k_par, img_c=C, embed_size=EMBED,
                         hidden_size=HIDDEN, vocab_size=VOCAB,
                         n_layers=NLAYERS)

    logits = jax.jit(our_model_forward)(params, x, y)
    logits = jax.block_until_ready(logits)

    assert logits.shape == (B, SEQ + 1, VOCAB), logits.shape
    assert jnp.all(jnp.isfinite(logits))
    print("KERNEL_OK")
</pallas_src>

<mosaic_0001>
module attributes {stable_mosaic.version = 11 : i64} {
  func.func @encoder_kernel(%arg0: memref<8x8x256xf32, #tpu.memory_space<vmem>>, %arg1: memref<8x2048xbf16, #tpu.memory_space<vmem>>, %arg2: memref<2048x128xbf16, #tpu.memory_space<vmem>>, %arg3: memref<1x128xf32, #tpu.memory_space<vmem>>, %arg4: memref<8x128xf32, #tpu.memory_space<vmem>>) attributes {dimension_semantics = [], scalar_prefetch = 0 : i64, scratch_operands = 0 : i64, tpu.core_type = #tpu.core_type<tc>} {
    %c0 = arith.constant 0 : index
    %c0_0 = arith.constant 0 : index
    %c0_1 = arith.constant 0 : index
    %0 = vector.load %arg0[%c0, %c0_0, %c0_1] : memref<8x8x256xf32, #tpu.memory_space<vmem>>, vector<8x8x256xf32>
    %cst = arith.constant dense<0.000000e+00> : vector<8x8xf32>
    %1 = vector.multi_reduction <add>, %0, %cst [2] : vector<8x8x256xf32> to vector<8x8xf32>
    %cst_2 = arith.constant 2.560000e+02 : f32
    %2 = vector.broadcast %cst_2 : f32 to vector<8x8xf32>
    %3 = arith.divf %1, %2 : vector<8x8xf32>
    %4 = arith.truncf %3 : vector<8x8xf32> to vector<8x8xbf16>
    %c0_3 = arith.constant 0 : index
    %c0_4 = arith.constant 0 : index
    %5 = vector.load %arg1[%c0_3, %c0_4] : memref<8x2048xbf16, #tpu.memory_space<vmem>>, vector<8x2048xbf16>
    %cst_5 = arith.constant dense<0.000000e+00> : vector<8x2048xf32>
    %6 = tpu.matmul %4, %5, %cst_5 {dimension_numbers = #tpu.dot_dimension_numbers<[1], [0], [0], [1], [0, 0, 1, 1], [], []>} : vector<8x8xbf16>, vector<8x2048xbf16>, vector<8x2048xf32> -> vector<8x2048xf32>
    %cst_6 = arith.constant 0.000000e+00 : f32
    %7 = vector.broadcast %cst_6 : f32 to vector<8x2048xf32>
    %8 = arith.maximumf %6, %7 : vector<8x2048xf32>
    %9 = arith.truncf %8 : vector<8x2048xf32> to vector<8x2048xbf16>
    %c0_7 = arith.constant 0 : index
    %c0_8 = arith.constant 0 : index
    %10 = vector.load %arg2[%c0_7, %c0_8] : memref<2048x128xbf16, #tpu.memory_space<vmem>>, vector<2048x128xbf16>
    %cst_9 = arith.constant dense<0.000000e+00> : vector<8x128xf32>
    %11 = tpu.matmul %9, %10, %cst_9 {dimension_numbers = #tpu.dot_dimension_numbers<[1], [0], [0], [1], [0, 0, 1, 1], [], []>} : vector<8x2048xbf16>, vector<2048x128xbf16>, vector<8x128xf32> -> vector<8x128xf32>
    %c0_10 = arith.constant 0 : index
    %c0_11 = arith.constant 0 : index
    %12 = vector.load %arg3[%c0_10, %c0_11] : memref<1x128xf32, #tpu.memory_space<vmem>>, vector<1x128xf32>
    %13 = vector.broadcast %12 : vector<1x128xf32> to vector<8x128xf32>
    %14 = arith.addf %11, %13 : vector<8x128xf32>
    %c0_12 = arith.constant 0 : index
    %c0_13 = arith.constant 0 : index
    %15 = vector.load %arg4[%c0_12, %c0_13] : memref<8x128xf32, #tpu.memory_space<vmem>>, vector<8x128xf32>
    tpu.vector_store %arg4[%c0_12, %c0_13], %14 {strides = array<i32>} : memref<8x128xf32, #tpu.memory_space<vmem>>, vector<8x128xf32>,
    return
  }
}

module attributes {stable_mosaic.version = 11 : i64} {
  func.func @matmul_bias_kernel(%arg0: i32, %arg1: i32, %arg2: memref<72x128xf32, #tpu.memory_space<vmem>>, %arg3: memref<128x256xbf16, #tpu.memory_space<vmem>>, %arg4: memref<1x256xf32, #tpu.memory_space<vmem>>, %arg5: memref<72x256xf32, #tpu.memory_space<vmem>>) attributes {dimension_semantics = [#tpu.dimension_semantics<parallel>, #tpu.dimension_semantics<parallel>], iteration_bounds = array<i64: 1, 2>, scalar_prefetch = 0 : i64, scratch_operands = 0 : i64, tpu.core_type = #tpu.core_type<tc>, window_params = [{transform_indices = @transform_0, window_bounds = array<i64: 72, 128>}, {transform_indices = @transform_1, window_bounds = array<i64: 128, 256>}, {transform_indices = @transform_2, window_bounds = array<i64: 1, 256>}, {transform_indices = @transform_3, window_bounds = array<i64: 72, 256>}]} {
    %c0 = arith.constant 0 : index
    %c0_0 = arith.constant 0 : index
    %0 = vector.load %arg2[%c0, %c0_0] : memref<72x128xf32, #tpu.memory_space<vmem>>, vector<72x128xf32>
    %1 = arith.truncf %0 : vector<72x128xf32> to vector<72x128xbf16>
    %c0_1 = arith.constant 0 : index
    %c0_2 = arith.constant 0 : index
    %2 = vector.load %arg3[%c0_1, %c0_2] : memref<128x256xbf16, #tpu.memory_space<vmem>>, vector<128x256xbf16>
    %cst = arith.constant dense<0.000000e+00> : vector<72x256xf32>
    %3 = tpu.matmul %1, %2, %cst {dimension_numbers = #tpu.dot_dimension_numbers<[1], [0], [0], [1], [0, 0, 1, 1], [], []>} : vector<72x128xbf16>, vector<128x256xbf16>, vector<72x256xf32> -> vector<72x256xf32>
    %c0_3 = arith.constant 0 : index
    %c0_4 = arith.constant 0 : index
    %4 = vector.load %arg4[%c0_3, %c0_4] : memref<1x256xf32, #tpu.memory_space<vmem>>, vector<1x256xf32>
    %5 = vector.broadcast %4 : vector<1x256xf32> to vector<72x256xf32>
    %6 = arith.addf %3, %5 : vector<72x256xf32>
    %c0_5 = arith.constant 0 : index
    %c0_6 = arith.constant 0 : index
    %7 = vector.load %arg5[%c0_5, %c0_6] : memref<72x256xf32, #tpu.memory_space<vmem>>, vector<72x256xf32>
    tpu.vector_store %arg5[%c0_5, %c0_6], %6 {strides = array<i32>} : memref<72x256xf32, #tpu.memory_space<vmem>>, vector<72x256xf32>,
    return
  }
  func.func @transform_0(%arg0: i32, %arg1: i32) -> (i32, i32) {
    %c0_i32 = arith.constant 0 : i32
    %c0_i32_0 = arith.constant 0 : i32
    return %arg0, %c0_i32 : i32, i32
  }
  func.func @transform_1(%arg0: i32, %arg1: i32) -> (i32, i32) {
    %c0_i32 = arith.constant 0 : i32
    %c0_i32_0 = arith.constant 0 : i32
    return %c0_i32, %arg1 : i32, i32
  }
  func.func @transform_2(%arg0: i32, %arg1: i32) -> (i32, i32) {
    %c0_i32 = arith.constant 0 : i32
    %c0_i32_0 = arith.constant 0 : i32
    return %c0_i32, %arg1 : i32, i32
  }
  func.func @transform_3(%arg0: i32, %arg1: i32) -> (i32, i32) {
    %c0_i32 = arith.constant 0 : i32
    return %arg0, %arg1 : i32, i32
  }
}

module attributes {stable_mosaic.version = 11 : i64} {
  func.func @lstm_recurrence_kernel(%arg0: i32, %arg1: memref<1x8x512xf32, #tpu.memory_space<vmem>>, %arg2: memref<128x512xbf16, #tpu.memory_space<vmem>>, %arg3: memref<1x8x128xf32, #tpu.memory_space<vmem>>, %arg4: memref<8x128xf32, #tpu.memory_space<vmem>>, %arg5: memref<8x128xf32, #tpu.memory_space<vmem>>) attributes {dimension_semantics = [#tpu.dimension_semantics<arbitrary>], iteration_bounds = array<i64: 9>, scalar_prefetch = 0 : i64, scratch_operands = 2 : i64, tpu.core_type = #tpu.core_type<tc>, window_params = [{transform_indices = @transform_0, window_bounds = array<i64: 1, 8, 512>}, {pipeline_mode = #tpu.pipeline_mode<synchronous>, transform_indices = @transform_1, window_bounds = array<i64: 128, 512>}, {transform_indices = @transform_2, window_bounds = array<i64: 1, 8, 128>}]} {
    %c0_i32 = arith.constant 0 : i32
    %0 = arith.cmpi eq, %arg0, %c0_i32 : i32
    %1 = arith.extui %0 : i1 to i32
    %c0_i32_0 = arith.constant 0 : i32
    %2 = arith.cmpi ne, %1, %c0_i32_0 : i32
    scf.if %2 {
      %cst_19 = arith.constant 0.000000e+00 : f32
      %41 = vector.broadcast %cst_19 : f32 to vector<8x128xf32>
      %c0_20 = arith.constant 0 : index
      %c0_21 = arith.constant 0 : index
      %42 = vector.load %arg4[%c0_20, %c0_21] : memref<8x128xf32, #tpu.memory_space<vmem>>, vector<8x128xf32>
      tpu.vector_store %arg4[%c0_20, %c0_21], %41 {strides = array<i32>} : memref<8x128xf32, #tpu.memory_space<vmem>>, vector<8x128xf32>,
      %cst_22 = arith.constant 0.000000e+00 : f32
      %43 = vector.broadcast %cst_22 : f32 to vector<8x128xf32>
      %c0_23 = arith.constant 0 : index
      %c0_24 = arith.constant 0 : index
      %44 = vector.load %arg5[%c0_23, %c0_24] : memref<8x128xf32, #tpu.memory_space<vmem>>, vector<8x128xf32>
      tpu.vector_store %arg5[%c0_23, %c0_24], %43 {strides = array<i32>} : memref<8x128xf32, #tpu.memory_space<vmem>>, vector<8x128xf32>,
    } else {
    }
    %c0 = arith.constant 0 : index
    %c0_1 = arith.constant 0 : index
    %c0_2 = arith.constant 0 : index
    %3 = vector.load %arg1[%c0, %c0_1, %c0_2] : memref<1x8x512xf32, #tpu.memory_space<vmem>>, vector<1x8x512xf32>
    %4 = vector.shape_cast %3 : vector<1x8x512xf32> to vector<8x512xf32>
    %c0_3 = arith.constant 0 : index
    %c0_4 = arith.constant 0 : index
    %5 = vector.load %arg4[%c0_3, %c0_4] : memref<8x128xf32, #tpu.memory_space<vmem>>, vector<8x128xf32>
    %6 = arith.truncf %5 : vector<8x128xf32> to vector<8x128xbf16>
    %c0_5 = arith.constant 0 : index
    %c0_6 = arith.constant 0 : index
    %7 = vector.load %arg2[%c0_5, %c0_6] : memref<128x512xbf16, #tpu.memory_space<vmem>>, vector<128x512xbf16>
    %cst = arith.constant dense<0.000000e+00> : vector<8x512xf32>
    %8 = tpu.matmul %6, %7, %cst {dimension_numbers = #tpu.dot_dimension_numbers<[1], [0], [0], [1], [0, 0, 1, 1], [], []>} : vector<8x128xbf16>, vector<128x512xbf16>, vector<8x512xf32> -> vector<8x512xf32>
    %9 = arith.addf %4, %8 : vector<8x512xf32>
    %10 = vector.extract_strided_slice %9 {offsets = [0, 0], sizes = [8, 128], strides = [1, 1]} : vector<8x512xf32> to vector<8x128xf32>
    %11 = arith.negf %10 : vector<8x128xf32>
    %12 = math.exp %11 : vector<8x128xf32>
    %cst_7 = arith.constant 1.000000e+00 : f32
    %13 = vector.broadcast %cst_7 : f32 to vector<8x128xf32>
    %14 = arith.addf %13, %12 : vector<8x128xf32>
    %15 = arith.divf %13, %14 : vector<8x128xf32>
    %16 = vector.extract_strided_slice %9 {offsets = [0, 128], sizes = [8, 128], strides = [1, 1]} : vector<8x512xf32> to vector<8x128xf32>
    %17 = arith.negf %16 : vector<8x128xf32>
    %18 = math.exp %17 : vector<8x128xf32>
    %cst_8 = arith.constant 1.000000e+00 : f32
    %19 = vector.broadcast %cst_8 : f32 to vector<8x128xf32>
    %20 = arith.addf %19, %18 : vector<8x128xf32>
    %21 = arith.divf %19, %20 : vector<8x128xf32>
    %22 = vector.extract_strided_slice %9 {offsets = [0, 256], sizes = [8, 128], strides = [1, 1]} : vector<8x512xf32> to vector<8x128xf32>
    %23 = math.tanh %22 : vector<8x128xf32>
    %24 = vector.extract_strided_slice %9 {offsets = [0, 384], sizes = [8, 128], strides = [1, 1]} : vector<8x512xf32> to vector<8x128xf32>
    %25 = arith.negf %24 : vector<8x128xf32>
    %26 = math.exp %25 : vector<8x128xf32>
    %cst_9 = arith.constant 1.000000e+00 : f32
    %27 = vector.broadcast %cst_9 : f32 to vector<8x128xf32>
    %28 = arith.addf %27, %26 : vector<8x128xf32>
    %29 = arith.divf %27, %28 : vector<8x128xf32>
    %c0_10 = arith.constant 0 : index
    %c0_11 = arith.constant 0 : index
    %30 = vector.load %arg5[%c0_10, %c0_11] : memref<8x128xf32, #tpu.memory_space<vmem>>, vector<8x128xf32>
    %31 = arith.mulf %21, %30 : vector<8x128xf32>
    %32 = arith.mulf %15, %23 : vector<8x128xf32>
    %33 = arith.addf %31, %32 : vector<8x128xf32>
    %34 = math.tanh %33 : vector<8x128xf32>
    %35 = arith.mulf %29, %34 : vector<8x128xf32>
    %c0_12 = arith.constant 0 : index
    %c0_13 = arith.constant 0 : index
    %36 = vector.load %arg5[%c0_12, %c0_13] : memref<8x128xf32, #tpu.memory_space<vmem>>, vector<8x128xf32>
    tpu.vector_store %arg5[%c0_12, %c0_13], %33 {strides = array<i32>} : memref<8x128xf32, #tpu.memory_space<vmem>>, vector<8x128xf32>,
    %c0_14 = arith.constant 0 : index
    %c0_15 = arith.constant 0 : index
    %37 = vector.load %arg4[%c0_14, %c0_15] : memref<8x128xf32, #tpu.memory_space<vmem>>, vector<8x128xf32>
    tpu.vector_store %arg4[%c0_14, %c0_15], %35 {strides = array<i32>} : memref<8x128xf32, #tpu.memory_space<vmem>>, vector<8x128xf32>,
    %c0_16 = arith.constant 0 : index
    %c0_17 = arith.constant 0 : index
    %c0_18 = arith.constant 0 : index
    %38 = vector.load %arg3[%c0_16, %c0_17, %c0_18] : memref<1x8x128xf32, #tpu.memory_space<vmem>>, vector<1x8x128xf32>
    %39 = vector.shape_cast %38 : vector<1x8x128xf32> to vector<8x128xf32>
    %40 = vector.shape_cast %35 : vector<8x128xf32> to vector<1x8x128xf32>
    tpu.vector_store %arg3[%c0_16, %c0_17, %c0_18], %40 {strides = array<i32>} : memref<1x8x128xf32, #tpu.memory_space<vmem>>, vector<1x8x128xf32>,
    return
  }
  func.func @transform_0(%arg0: i32) -> (i32, i32, i32) {
    %c0_i32 = arith.constant 0 : i32
    %c0_i32_0 = arith.constant 0 : i32
    %c0_i32_1 = arith.constant 0 : i32
    return %arg0, %c0_i32, %c0_i32_0 : i32, i32, i32
  }
  func.func @transform_1(%arg0: i32) -> (i32, i32) {
    %c0_i32 = arith.constant 0 : i32
    %c0_i32_0 = arith.constant 0 : i32
    %c0_i32_1 = arith.constant 0 : i32
    return %c0_i32, %c0_i32_0 : i32, i32
  }
  func.func @transform_2(%arg0: i32) -> (i32, i32, i32) {
    %c0_i32 = arith.constant 0 : i32
    %c0_i32_0 = arith.constant 0 : i32
    %c0_i32_1 = arith.constant 0 : i32
    return %arg0, %c0_i32, %c0_i32_0 : i32, i32, i32
  }
}

module attributes {stable_mosaic.version = 11 : i64} {
  func.func @matmul_bias_kernel(%arg0: i32, %arg1: i32, %arg2: memref<72x128xf32, #tpu.memory_space<vmem>>, %arg3: memref<128x256xbf16, #tpu.memory_space<vmem>>, %arg4: memref<1x256xf32, #tpu.memory_space<vmem>>, %arg5: memref<72x256xf32, #tpu.memory_space<vmem>>) attributes {dimension_semantics = [#tpu.dimension_semantics<parallel>, #tpu.dimension_semantics<parallel>], iteration_bounds = array<i64: 1, 1>, scalar_prefetch = 0 : i64, scratch_operands = 0 : i64, tpu.core_type = #tpu.core_type<tc>, window_params = [{transform_indices = @transform_0, window_bounds = array<i64: 72, 128>}, {transform_indices = @transform_1, window_bounds = array<i64: 128, 256>}, {transform_indices = @transform_2, window_bounds = array<i64: 1, 256>}, {transform_indices = @transform_3, window_bounds = array<i64: 72, 256>}]} {
    %c0 = arith.constant 0 : index
    %c0_0 = arith.constant 0 : index
    %0 = vector.load %arg2[%c0, %c0_0] : memref<72x128xf32, #tpu.memory_space<vmem>>, vector<72x128xf32>
    %1 = arith.truncf %0 : vector<72x128xf32> to vector<72x128xbf16>
    %c0_1 = arith.constant 0 : index
    %c0_2 = arith.constant 0 : index
    %2 = vector.load %arg3[%c0_1, %c0_2] : memref<128x256xbf16, #tpu.memory_space<vmem>>, vector<128x256xbf16>
    %cst = arith.constant dense<0.000000e+00> : vector<72x256xf32>
    %3 = tpu.matmul %1, %2, %cst {dimension_numbers = #tpu.dot_dimension_numbers<[1], [0], [0], [1], [0, 0, 1, 1], [], []>} : vector<72x128xbf16>, vector<128x256xbf16>, vector<72x256xf32> -> vector<72x256xf32>
    %c0_3 = arith.constant 0 : index
    %c0_4 = arith.constant 0 : index
    %4 = vector.load %arg4[%c0_3, %c0_4] : memref<1x256xf32, #tpu.memory_space<vmem>>, vector<1x256xf32>
    %5 = vector.broadcast %4 : vector<1x256xf32> to vector<72x256xf32>
    %6 = arith.addf %3, %5 : vector<72x256xf32>
    %c0_5 = arith.constant 0 : index
    %c0_6 = arith.constant 0 : index
    %7 = vector.load %arg5[%c0_5, %c0_6] : memref<72x256xf32, #tpu.memory_space<vmem>>, vector<72x256xf32>
    tpu.vector_store %arg5[%c0_5, %c0_6], %6 {strides = array<i32>} : memref<72x256xf32, #tpu.memory_space<vmem>>, vector<72x256xf32>,
    return
  }
  func.func @transform_0(%arg0: i32, %arg1: i32) -> (i32, i32) {
    %c0_i32 = arith.constant 0 : i32
    %c0_i32_0 = arith.constant 0 : i32
    return %arg0, %c0_i32 : i32, i32
  }
  func.func @transform_1(%arg0: i32, %arg1: i32) -> (i32, i32) {
    %c0_i32 = arith.constant 0 : i32
    %c0_i32_0 = arith.constant 0 : i32
    return %c0_i32, %arg1 : i32, i32
  }
  func.func @transform_2(%arg0: i32, %arg1: i32) -> (i32, i32) {
    %c0_i32 = arith.constant 0 : i32
    %c0_i32_0 = arith.constant 0 : i32
    return %c0_i32, %arg1 : i32, i32
  }
  func.func @transform_3(%arg0: i32, %arg1: i32) -> (i32, i32) {
    %c0_i32 = arith.constant 0 : i32
    return %arg0, %arg1 : i32, i32
  }
}

</mosaic_0001>

<llo_original>
// kernel: our_model_forward.7
$region0: #{our_model_forward.7}
  #allocation0 [shape = 'u32[]', space=smem, size = 0x4, offset = 0x4, fixed_abs, tag = 'smem constant byte address 0x4 - core index']
  #allocation1 [shape = 'u32[72,128]{1,0:T(1,128)}', space=vmem, size = 0x9000, scoped, tag = 'internal scratch']
  %s0 = inlined_call_operand.vmem [shape: f32[72,128], index: 0, kind: input, shape index: {}]
  %s1 = inlined_call_operand.vmem [shape: bf16[128,512], index: 1, kind: input, shape index: {}]
  %s2 = inlined_call_operand.vmem [shape: f32[1,512], index: 2, kind: input, shape index: {}]
  %s3 = inlined_call_operand.vmem [shape: f32[72,512], index: 3, kind: output, shape index: {}]
  %s4 = sld [smem:[#allocation0]]
  $region102: #{our_model_forward.7} parent=0
    _
  %s6 = ssub.s32 1, %s4
  %s7 = scalar_select 0, %s6, %s4
  $region1: #{our_model_forward.7} parent=0
    #allocation2 [shape = 'u8[131072]{0}', space=vmem, size = 0x20000, scoped, tag = 'input window, operand 1']
    #allocation3 [shape = 'u8[147456]{0}', space=vmem, size = 0x24000, scoped, tag = 'output window, operand 0']
    loop: start=0, step=1, limit=4
    $region2: #{our_model_forward.7} parent=1 // loop_pre_header
      _
    $region3: #{our_model_forward.7} parent=1 // loop_header
      %s9 = sphi 0, %s13
      %p10 = scmp.ge.s32.totalorder %s9, 4
      %s16 = sphi 0, %s28
      %s17 = sphi 0, %s24
      %s18 = sphi 0, %s16
      %s19 = sphi 0, %s17
      %s20 = sphi 0, %s18
      %s21 = sphi 0, %s19
      %s31 = sphi 0, %s33
      %s34 = sphi 0, %s31
      %s35 = sphi 0, %s34
      %s51 = sphi 0, %s35
      %s57 = sphi 0, %s59
      %s60 = sphi 0, %s57
      %s61 = sphi 0, %s60
      %s77 = sphi 0, %s61
      %s83 = sphi 0, %s85
      %s86 = sphi 0, %s83
      %s87 = sphi 0, %s86
      %s103 = sphi 0, %s87
      %s111 = sphi 0, %s113
      %s114 = sphi 0, %s111
      %s115 = sphi 0, %s114
      %s131 = sphi 0, %s115
    $region4: #{our_model_forward.7} parent=1 // loop_header_branch
      %12 = sbr.rel (%p10) target = $region8
    $region5: #{our_model_forward.7} parent=1 // loop_body
      %s14 = ssub.s32 %s9, 1
      %s15 = ssub.s32 %s9, 2
      %s22 = sadd.s32 1, %s17
      %p23 = scmp.ge.s32.totalorder %s22, 2
      %s24 = scalar_select %p23, 0, %s22
      %s25 = sadd.s32 1, %s16
      %s26 = scalar_select %p23, %s25, %s16
      %p27 = scmp.ge.s32.totalorder %s26, 1
      %s28 = scalar_select %p27, 0, %s26
      %s29 = ssub.s32 %s16, %s28
      %p30 = scmp.eq.s32.totalorder %s29, 0
      %s32 = sadd.s32 %s31, 1
      %s33 = scalar_select %p30, %s31, %s32
      %p36 = pneg %p30
      %p37 = scmp.eq.s32.totalorder %s9, 1
      %p38 = por %p36, %p37
      %p39 = scmp.ne.s32.totalorder %s31, %s34
      %p40 = scmp.eq.s32.totalorder %s9, 0
      %p41 = por %p39, %p40
      %p42 = scmp.ne.s32.totalorder %s31, %s34
      %p43 = scmp.eq.s32.totalorder %s14, 1
      %p44 = por %p42, %p43
      %p45 = scmp.ne.s32.totalorder %s34, %s35
      %p46 = scmp.eq.s32.totalorder %s14, 0
      %p47 = por %p45, %p46
      %p48 = scmp.ne.s32.totalorder %s34, %s35
      %p49 = scmp.eq.s32.totalorder %s15, 1
      %p50 = por %p48, %p49
      %p52 = scmp.ne.s32.totalorder %s35, %s51
      %p53 = scmp.eq.s32.totalorder %s15, 0
      %p54 = por %p52, %p53
      %s55 = ssub.s32 %s17, %s24
      %p56 = scmp.eq.s32.totalorder %s55, 0
      %s58 = sadd.s32 %s57, 1
      %s59 = scalar_select %p56, %s57, %s58
      %p62 = pneg %p56
      %p63 = scmp.eq.s32.totalorder %s9, 1
      %p64 = por %p62, %p63
      %p65 = scmp.ne.s32.totalorder %s57, %s60
      %p66 = scmp.eq.s32.totalorder %s9, 0
      %p67 = por %p65, %p66
      %p68 = scmp.ne.s32.totalorder %s57, %s60
      %p69 = scmp.eq.s32.totalorder %s14, 1
      %p70 = por %p68, %p69
      %p71 = scmp.ne.s32.totalorder %s60, %s61
      %p72 = scmp.eq.s32.totalorder %s14, 0
      %p73 = por %p71, %p72
      %p74 = scmp.ne.s32.totalorder %s60, %s61
      %p75 = scmp.eq.s32.totalorder %s15, 1
      %p76 = por %p74, %p75
      %p78 = scmp.ne.s32.totalorder %s61, %s77
      %p79 = scmp.eq.s32.totalorder %s15, 0
      %p80 = por %p78, %p79
      %s81 = ssub.s32 %s17, %s24
      %p82 = scmp.eq.s32.totalorder %s81, 0
      %s84 = sadd.s32 %s83, 1
      %s85 = scalar_select %p82, %s83, %s84
      %p88 = pneg %p82
      %p89 = scmp.eq.s32.totalorder %s9, 1
      %p90 = por %p88, %p89
      %p91 = scmp.ne.s32.totalorder %s83, %s86
      %p92 = scmp.eq.s32.totalorder %s9, 0
      %p93 = por %p91, %p92
      %p94 = scmp.ne.s32.totalorder %s83, %s86
      %p95 = scmp.eq.s32.totalorder %s14, 1
      %p96 = por %p94, %p95
      %p97 = scmp.ne.s32.totalorder %s86, %s87
      %p98 = scmp.eq.s32.totalorder %s14, 0
      %p99 = por %p97, %p98
      %p100 = scmp.ne.s32.totalorder %s86, %s87
      %p101 = scmp.eq.s32.totalorder %s15, 1
      %p102 = por %p100, %p101
      %p104 = scmp.ne.s32.totalorder %s87, %s103
      %p105 = scmp.eq.s32.totalorder %s15, 0
      %p106 = por %p104, %p105
      %s107 = ssub.s32 %s16, %s28
      %s108 = ssub.s32 %s17, %s24
      %s109 = sor.u32 %s107, %s108
      %p110 = scmp.eq.s32.totalorder %s109, 0
      %s112 = sadd.s32 %s111, 1
      %s113 = scalar_select %p110, %s111, %s112
      %p116 = pneg %p110
      %p117 = scmp.eq.s32.totalorder %s9, 1
      %p118 = por %p116, %p117
      %p119 = scmp.ne.s32.totalorder %s111, %s114
      %p120 = scmp.eq.s32.totalorder %s9, 0
      %p121 = por %p119, %p120
      %p122 = scmp.ne.s32.totalorder %s111, %s114
      %p123 = scmp.eq.s32.totalorder %s14, 1
      %p124 = por %p122, %p123
      %p125 = scmp.ne.s32.totalorder %s114, %s115
      %p126 = scmp.eq.s32.totalorder %s14, 0
      %p127 = por %p125, %p126
      %p128 = scmp.ne.s32.totalorder %s114, %s115
      %p129 = scmp.eq.s32.totalorder %s15, 1
      %p130 = por %p128, %p129
      %p132 = scmp.ne.s32.totalorder %s115, %s131
      %p133 = scmp.eq.s32.totalorder %s15, 0
      %p134 = por %p132, %p133
      %p135 = scmp.le.s32.totalorder 1, %s9
      %p136 = scmp.lt.s32.totalorder %s9, 3
      %p137 = pnand %p135, %p136
      %p138 = pneg %p137
      // Predicated region
      $region9: #{our_model_forward.7} parent=5 // pred_check
        _
      $region10: #{our_model_forward.7} parent=5 // pred_check_branch
        %140 = sbr.rel (%p137) target = $region12
      $region11: #{our_model_forward.7} parent=5 // pred_region
        %s141 = ssub.s32 %s9, 1
        // Predicated region
        $region13: #{our_model_forward.7} parent=11 // pred_check
          %p142 = pneg %p47
        $region14: #{our_model_forward.7} parent=11 // pred_check_branch
          %144 = sbr.rel (%p142) target = $region16
        $region15: #{our_model_forward.7} parent=11 // pred_region
          %s145 = smul.u32 9, %s18
          %p146 = scmp.lt.s32.totalorder %s145, 8
          %s147 = scalar_select %p146, %s145, 8
          %s148 = smul.addr %s147, 8
          %s149 = scalar_lea.vmem %s0, %s148
          %s150 = smul.u32 9, %s18
        $region16: #{our_model_forward.7} parent=11 // pred_fallthru
          _
      $region12: #{our_model_forward.7} parent=5 // pred_fallthru
        _
      %p151 = scmp.lt.s32.totalorder %s9, 2
      // Predicated region
      $region17: #{our_model_forward.7} parent=5 // pred_check
        %p152 = pneg %p151
      $region18: #{our_model_forward.7} parent=5 // pred_check_branch
        %154 = sbr.rel (%p152) target = $region20
      $region19: #{our_model_forward.7} parent=5 // pred_region
        // Predicated region
        $region21: #{our_model_forward.7} parent=19 // pred_check
          %p155 = pneg %p67
        $region22: #{our_model_forward.7} parent=19 // pred_check_branch
          %157 = sbr.rel (%p155) target = $region24
        $region23: #{our_model_forward.7} parent=19 // pred_region
          %s158 = sand.u32 %s57, 1
          %s159 = sand.u32 %s57, 1
          %s160 = smul.addr %s159, 128
          %s161 = scalar_lea.vmem [#allocation2], %s160
          %s162 = smul.u32 2, %s17
          %s163 = smul.addr %s162, 4
          %s164 = scalar_lea.vmem %s1, %s163
          // Predicated region
          $region25: #{our_model_forward.7} parent=23 // pred_check
            _
          $region26: #{our_model_forward.7} parent=23 // pred_check_branch
            %166 = sbr.rel (0) target = $region28
          $region27: #{our_model_forward.7} parent=23 // pred_region
            // Predicated region
            $region29: #{our_model_forward.7} parent=27 // pred_check
              _
            $region30: #{our_model_forward.7} parent=27 // pred_check_branch
              %168 = sbr.rel (0) target = $region32
            $region31: #{our_model_forward.7} parent=27 // pred_region
              // Predicated region
              $region44: #{our_model_forward.7} parent=31 // pred_check
                _
              $region45: #{our_model_forward.7} parent=31 // pred_check_branch
                %214 = sbr.rel (0) target = $region47
              $region46: #{our_model_forward.7} parent=31 // pred_region
                loop: start=0, step=1, limit=1
                $region48: #{our_model_forward.7} parent=46 // loop_pre_header
                  _
                $region49: #{our_model_forward.7} parent=46 // loop_header
                  %s216 = sphi 0, %s220
                  %p217 = scmp.ge.s32.totalorder %s216, 1
                  %s221 = sphi %s164, %s164
                  %s222 = sphi %s161, %s161
                $region50: #{our_model_forward.7} parent=46 // loop_header_branch
                  %219 = sbr.rel (%p217) target = $region54
                $region51: #{our_model_forward.7} parent=46 // loop_body
                  %v223 = vld [vmem:[%s221] sm:$0xff]
                  %224 = vst [vmem:[%s222] sm:$0xff] %v223
                  %v225 = vld [vmem:[%s221 + $0x10] sm:$0xff]
                  %226 = vst [vmem:[%s222 + $0x8] sm:$0xff] %v225
                  %v227 = vld [vmem:[%s221 + $0x20] sm:$0xff]
                  %228 = vst [vmem:[%s222 + $0x10] sm:$0xff] %v227
                  %v229 = vld [vmem:[%s221 + $0x30] sm:$0xff]
                  %230 = vst [vmem:[%s222 + $0x18] sm:$0xff] %v229
                  %v231 = vld [vmem:[%s221 + $0x40] sm:$0xff]
                  %232 = vst [vmem:[%s222 + $0x20] sm:$0xff] %v231
                  %v233 = vld [vmem:[%s221 + $0x50] sm:$0xff]
                  %234 = vst [vmem:[%s222 + $0x28] sm:$0xff] %v233
                  %v235 = vld [vmem:[%s221 + $0x60] sm:$0xff]
                  %236 = vst [vmem:[%s222 + $0x30] sm:$0xff] %v235
                  %v237 = vld [vmem:[%s221 + $0x70] sm:$0xff]
                  %238 = vst [vmem:[%s222 + $0x38] sm:$0xff] %v237
                  %v239 = vld [vmem:[%s221 + $0x80] sm:$0xff]
                  %240 = vst [vmem:[%s222 + $0x40] sm:$0xff] %v239
                  %v241 = vld [vmem:[%s221 + $0x90] sm:$0xff]
                  %242 = vst [vmem:[%s222 + $0x48] sm:$0xff] %v241
                  %v243 = vld [vmem:[%s221 + $0xa0] sm:$0xff]
                  %244 = vst [vmem:[%s222 + $0x50] sm:$0xff] %v243
                  %v245 = vld [vmem:[%s221 + $0xb0] sm:$0xff]
                  %246 = vst [vmem:[%s222 + $0x58] sm:$0xff] %v245
                  %v247 = vld [vmem:[%s221 + $0xc0] sm:$0xff]
                  %248 = vst [vmem:[%s222 + $0x60] sm:$0xff] %v247
                  %v249 = vld [vmem:[%s221 + $0xd0] sm:$0xff]
                  %250 = vst [vmem:[%s222 + $0x68] sm:$0xff] %v249
                  %v251 = vld [vmem:[%s221 + $0xe0] sm:$0xff]
                  %252 = vst [vmem:[%s222 + $0x70] sm:$0xff] %v251
                  %v253 = vld [vmem:[%s221 + $0xf0] sm:$0xff]
                  %254 = vst [vmem:[%s222 + $0x78] sm:$0xff] %v253
                $region52: #{our_model_forward.7} parent=46 // loop_footer
                  %s220 = sadd.s32 1, %s216
                $region53: #{our_model_forward.7} parent=46 // loop_footer_branch
                  %215 = sbr.rel target = $region49
                $region54: #{our_model_forward.7} parent=46 // loop_exit
                  _
              $region47: #{our_model_forward.7} parent=31 // pred_fallthru
                _
              // Predicated region
              $region55: #{our_model_forward.7} parent=31 // pred_check
                _
              $region56: #{our_model_forward.7} parent=31 // pred_check_branch
                %256 = sbr.rel target = $region58
              $region57: #{our_model_forward.7} parent=31 // pred_region
                _
              $region58: #{our_model_forward.7} parent=31 // pred_fallthru
                _
            $region32: #{our_model_forward.7} parent=27 // pred_fallthru
              _
            // Predicated region
            $region33: #{our_model_forward.7} parent=27 // pred_check
              _
            $region34: #{our_model_forward.7} parent=27 // pred_check_branch
              %170 = sbr.rel target = $region36
            $region35: #{our_model_forward.7} parent=27 // pred_region
              %s172 = ssub.s32 256, 1
              loop: start=0, step=1, limit=1
              $region37: #{our_model_forward.7} parent=35 // loop_pre_header
                _
              $region38: #{our_model_forward.7} parent=35 // loop_header
                %s174 = sphi 0, %s178
                %p175 = scmp.ge.s32.totalorder %s174, 1
                %s179 = sphi %s164, %s164
                %s180 = sphi %s161, %s161
              $region39: #{our_model_forward.7} parent=35 // loop_header_branch
                %177 = sbr.rel (%p175) target = $region43
              $region40: #{our_model_forward.7} parent=35 // loop_body
                %v181 = vld [vmem:[%s179] sm:%s172]
                %182 = vst [vmem:[%s180] sm:%s172] %v181
                %v183 = vld [vmem:[%s179 + $0x10] sm:%s172]
                %184 = vst [vmem:[%s180 + $0x8] sm:%s172] %v183
                %v185 = vld [vmem:[%s179 + $0x20] sm:%s172]
                %186 = vst [vmem:[%s180 + $0x10] sm:%s172] %v185
                %v187 = vld [vmem:[%s179 + $0x30] sm:%s172]
                %188 = vst [vmem:[%s180 + $0x18] sm:%s172] %v187
                %v189 = vld [vmem:[%s179 + $0x40] sm:%s172]
                %190 = vst [vmem:[%s180 + $0x20] sm:%s172] %v189
                %v191 = vld [vmem:[%s179 + $0x50] sm:%s172]
                %192 = vst [vmem:[%s180 + $0x28] sm:%s172] %v191
                %v193 = vld [vmem:[%s179 + $0x60] sm:%s172]
                %194 = vst [vmem:[%s180 + $0x30] sm:%s172] %v193
                %v195 = vld [vmem:[%s179 + $0x70] sm:%s172]
                %196 = vst [vmem:[%s180 + $0x38] sm:%s172] %v195
                %v197 = vld [vmem:[%s179 + $0x80] sm:%s172]
                %198 = vst [vmem:[%s180 + $0x40] sm:%s172] %v197
                %v199 = vld [vmem:[%s179 + $0x90] sm:%s172]
                %200 = vst [vmem:[%s180 + $0x48] sm:%s172] %v199
                %v201 = vld [vmem:[%s179 + $0xa0] sm:%s172]
                %202 = vst [vmem:[%s180 + $0x50] sm:%s172] %v201
                %v203 = vld [vmem:[%s179 + $0xb0] sm:%s172]
                %204 = vst [vmem:[%s180 + $0x58] sm:%s172] %v203
                %v205 = vld [vmem:[%s179 + $0xc0] sm:%s172]
                %206 = vst [vmem:[%s180 + $0x60] sm:%s172] %v205
                %v207 = vld [vmem:[%s179 + $0xd0] sm:%s172]
                %208 = vst [vmem:[%s180 + $0x68] sm:%s172] %v207
                %v209 = vld [vmem:[%s179 + $0xe0] sm:%s172]
                %210 = vst [vmem:[%s180 + $0x70] sm:%s172] %v209
                %v211 = vld [vmem:[%s179 + $0xf0] sm:%s172]
                %212 = vst [vmem:[%s180 + $0x78] sm:%s172] %v211
              $region41: #{our_model_forward.7} parent=35 // loop_footer
                %s178 = sadd.s32 1, %s174
              $region42: #{our_model_forward.7} parent=35 // loop_footer_branch
                %173 = sbr.rel target = $region38
              $region43: #{our_model_forward.7} parent=35 // loop_exit
                _
            $region36: #{our_model_forward.7} parent=27 // pred_fallthru
              _
          $region28: #{our_model_forward.7} parent=23 // pred_fallthru
            _
          %257 = vnop
        $region24: #{our_model_forward.7} parent=19 // pred_fallthru
          _
        // Predicated region
        $region59: #{our_model_forward.7} parent=19 // pred_check
          %p258 = pneg %p93
        $region60: #{our_model_forward.7} parent=19 // pred_check_branch
          %260 = sbr.rel (%p258) target = $region62
        $region61: #{our_model_forward.7} parent=19 // pred_region
          %s261 = smul.u32 2, %s17
          %p262 = scmp.lt.s32.totalorder %s261, 3
          %s263 = scalar_select %p262, %s261, 3
          %s264 = scalar_lea.vmem %s2, %s263
          %s265 = smul.u32 2, %s17
        $region62: #{our_model_forward.7} parent=19 // pred_fallthru
          _
      $region20: #{our_model_forward.7} parent=5 // pred_fallthru
        _
      %p266 = scmp.le.s32.totalorder 1, %s9
      %p267 = scmp.lt.s32.totalorder %s9, 3
      %p268 = pnand %p266, %p267
      %p269 = pneg %p268
      // Predicated region
      $region63: #{our_model_forward.7} parent=5 // pred_check
        _
      $region64: #{our_model_forward.7} parent=5 // pred_check_branch
        %271 = sbr.rel (%p268) target = $region66
      $region65: #{our_model_forward.7} parent=5 // pred_region
        %s272 = ssub.s32 %s9, 1
        %s273 = sand.u32 %s60, 1
        %s274 = sand.u32 %s60, 1
        %s275 = smul.addr %s274, 128
        %s276 = scalar_lea.vmem [#allocation2], %s275
        // Predicated region
        $region67: #{our_model_forward.7} parent=65 // pred_check
          %p277 = pneg %p73
        $region68: #{our_model_forward.7} parent=65 // pred_check_branch
          %279 = sbr.rel (%p277) target = $region70
        $region69: #{our_model_forward.7} parent=65 // pred_region
          _
        $region70: #{our_model_forward.7} parent=65 // pred_fallthru
          _
        %s280 = smul.u32 9, %s18
        %p281 = scmp.lt.s32.totalorder %s280, 8
        %s282 = scalar_select %p281, %s280, 8
        %s283 = smul.addr %s282, 8
        %s284 = scalar_lea.vmem %s0, %s283
        %p285 = pneg %p47
        %p286 = pneg %p44
        %s287 = sand.u32 %s60, 1
        %s288 = sand.u32 %s60, 1
        %s289 = smul.addr %s288, 128
        %s290 = scalar_lea.vmem [#allocation2], %s289
        %p291 = pneg %p73
        %p292 = pneg %p70
        %s293 = smul.u32 2, %s19
        %p294 = scmp.lt.s32.totalorder %s293, 3
        %s295 = scalar_select %p294, %s293, 3
        %s296 = scalar_lea.vmem %s2, %s295
        %p297 = pneg %p99
        %p298 = pneg %p96
        %p299 = pneg %p127
        %p300 = pneg %p124
        %s301 = sand.u32 %s114, 1
        %s302 = sand.u32 %s114, 1
        %s303 = smul.addr %s302, 144
        %s304 = scalar_lea.vmem [#allocation3], %s303
        %s305 = smul.u32 9, %s18
        %p306 = scmp.lt.s32.totalorder %s305, 8
        %s307 = scalar_select %p306, %s305, 8
        %s308 = smul.addr %s307, 8
        %s309 = scalar_lea.vmem %s0, %s308
        %s310 = smul.u32 9, %s18
        %s311 = smul.u32 2, %s19
        %s312 = smul.u32 2, %s19
        %p313 = scmp.lt.s32.totalorder %s312, 3
        %s314 = scalar_select %p313, %s312, 3
        %s315 = scalar_lea.vmem %s2, %s314
        %s316 = smul.u32 2, %s19
        %s317 = smul.u32 9, %s18
        %s318 = smul.u32 2, %s19
        %v319 = vld [vmem:[%s309] sm:$0xff]
        %v320 = vld [vmem:[%s309 + $0x8] sm:$0xff]
        %v321 = vld [vmem:[%s309 + $0x10] sm:$0xff]
        %v322 = vld [vmem:[%s309 + $0x18] sm:$0xff]
        %v323 = vld [vmem:[%s309 + $0x20] sm:$0xff]
        %v324 = vld [vmem:[%s309 + $0x28] sm:$0xff]
        %v325 = vld [vmem:[%s309 + $0x30] sm:$0xff]
        %v326 = vld [vmem:[%s309 + $0x38] sm:$0xff]
        %v327 = vld [vmem:[%s309 + $0x40] sm:$0xff]
        %v328 = vpack.c.bf16 %v320, %v319
        %v329 = vpack.c.bf16 %v322, %v321
        %v330 = vpack.c.bf16 %v324, %v323
        %v331 = vpack.c.bf16 %v326, %v325
        %v332 = vpack.c.bf16 %v327, %v327
        %v333 = vld [vmem:[%s276] sm:$0xff]
        %v334 = vld [vmem:[%s276 + $0x8] sm:$0xff]
        %v335 = vld [vmem:[%s276 + $0x10] sm:$0xff]
        %v336 = vld [vmem:[%s276 + $0x18] sm:$0xff]
        %v337 = vld [vmem:[%s276 + $0x20] sm:$0xff]
        %v338 = vld [vmem:[%s276 + $0x28] sm:$0xff]
        %v339 = vld [vmem:[%s276 + $0x30] sm:$0xff]
        %v340 = vld [vmem:[%s276 + $0x38] sm:$0xff]
        %v341 = vld [vmem:[%s276 + $0x40] sm:$0xff]
        %v342 = vld [vmem:[%s276 + $0x48] sm:$0xff]
        %v343 = vld [vmem:[%s276 + $0x50] sm:$0xff]
        %v344 = vld [vmem:[%s276 + $0x58] sm:$0xff]
        %v345 = vld [vmem:[%s276 + $0x60] sm:$0xff]
        %v346 = vld [vmem:[%s276 + $0x68] sm:$0xff]
        %v347 = vld [vmem:[%s276 + $0x70] sm:$0xff]
        %v348 = vld [vmem:[%s276 + $0x78] sm:$0xff]
        %v349 = vld [vmem:[%s315] sm:$0x3]
        %v351 = vperm.slane %v349, 0
        %v352 = vperm.slane %v349, 1
        %v371 = vunpack.c.l.b16 %v333
        %v372 = vunpack.c.h.b16 %v333
        %v373 = vunpack.c.l.b16 %v334
        %v374 = vunpack.c.h.b16 %v334
        %v375 = vunpack.c.l.b16 %v335
        %v376 = vunpack.c.h.b16 %v335
        %v377 = vunpack.c.l.b16 %v336
        %v378 = vunpack.c.h.b16 %v336
        %v379 = vunpack.c.l.b16 %v337
        %v380 = vunpack.c.h.b16 %v337
        %v381 = vunpack.c.l.b16 %v338
        %v382 = vunpack.c.h.b16 %v338
        %v383 = vunpack.c.l.b16 %v339
        %v384 = vunpack.c.h.b16 %v339
        %v385 = vunpack.c.l.b16 %v340
        %v386 = vunpack.c.h.b16 %v340
        %v387 = vunpack.c.l.b16 %v341
        %v388 = vunpack.c.h.b16 %v341
        %v389 = vunpack.c.l.b16 %v342
        %v390 = vunpack.c.h.b16 %v342
        %v391 = vunpack.c.l.b16 %v343
        %v392 = vunpack.c.h.b16 %v343
        %v393 = vunpack.c.l.b16 %v344
        %v394 = vunpack.c.h.b16 %v344
        %v395 = vunpack.c.l.b16 %v345
        %v396 = vunpack.c.h.b16 %v345
        %v397 = vunpack.c.l.b16 %v346
        %v398 = vunpack.c.h.b16 %v346
        %v399 = vunpack.c.l.b16 %v347
        %v400 = vunpack.c.h.b16 %v347
        %v401 = vunpack.c.l.b16 %v348
        %v402 = vunpack.c.h.b16 %v348
        %v403 = vpack.c.b16 %v373, %v371
        %v404 = vpack.c.b16 %v374, %v372
        %v405 = vpack.c.b16 %v377, %v375
        %v406 = vpack.c.b16 %v378, %v376
        %v407 = vpack.c.b16 %v381, %v379
        %v408 = vpack.c.b16 %v382, %v380
        %v409 = vpack.c.b16 %v385, %v383
        %v410 = vpack.c.b16 %v386, %v384
        %v411 = vpack.c.b16 %v389, %v387
        %v412 = vpack.c.b16 %v390, %v388
        %v413 = vpack.c.b16 %v393, %v391
        %v414 = vpack.c.b16 %v394, %v392
        %v415 = vpack.c.b16 %v397, %v395
        %v416 = vpack.c.b16 %v398, %v396
        %v417 = vpack.c.b16 %v401, %v399
        %v418 = vpack.c.b16 %v402, %v400
        %435 = vmatpush.bf16.msra.mxu0 %v417
        %436 = vmatpush.bf16.msra.mxu0 %v415
        %437 = vmatpush.bf16.msra.mxu0 %v413
        %438 = vmatpush.bf16.msra.mxu0 %v411
        %439 = vmatpush.bf16.msra.mxu0 %v409
        %440 = vmatpush.bf16.msra.mxu0 %v407
        %441 = vmatpush.bf16.msra.mxu0 %v405
        %442 = vmatpush.bf16.msra.mxu0 %v403
        %443 = vmatmul.bf16.gmra.mxu0 %v328
        %v444 = vpop.f32.mrf.mxu0
        %v445 = vadd.f32 %v351, %v444
        %v446 = vpop.f32.mrf.mxu0
        %v447 = vadd.f32 %v351, %v446
        %448 = vmatmul.bf16.gmra.mxu0 %v329
        %v449 = vpop.f32.mrf.mxu0
        %v450 = vadd.f32 %v351, %v449
        %v451 = vpop.f32.mrf.mxu0
        %v452 = vadd.f32 %v351, %v451
        %453 = vmatmul.bf16.gmra.mxu0 %v330
        %v454 = vpop.f32.mrf.mxu0
        %v455 = vadd.f32 %v351, %v454
        %v456 = vpop.f32.mrf.mxu0
        %v457 = vadd.f32 %v351, %v456
        %458 = vmatmul.bf16.gmra.mxu0 %v331
        %v459 = vpop.f32.mrf.mxu0
        %v460 = vadd.f32 %v351, %v459
        %v461 = vpop.f32.mrf.mxu0
        %v462 = vadd.f32 %v351, %v461
        %463 = vmatmul.bf16.gmra.mxu0 %v332
        %v464 = vpop.f32.mrf.mxu0
        %v465 = vadd.f32 %v351, %v464
        %v466 = vpop.f32.mrf.mxu0
        %467 = vdwg.mxu0
        %468 = vmatpush.bf16.msra.mxu0 %v418
        %469 = vmatpush.bf16.msra.mxu0 %v416
        %470 = vmatpush.bf16.msra.mxu0 %v414
        %471 = vmatpush.bf16.msra.mxu0 %v412
        %472 = vmatpush.bf16.msra.mxu0 %v410
        %473 = vmatpush.bf16.msra.mxu0 %v408
        %474 = vmatpush.bf16.msra.mxu0 %v406
        %475 = vmatpush.bf16.msra.mxu0 %v404
        %476 = vmatmul.bf16.gmra.mxu0 %v328
        %v477 = vpop.f32.mrf.mxu0
        %v478 = vadd.f32 %v352, %v477
        %v479 = vpop.f32.mrf.mxu0
        %v480 = vadd.f32 %v352, %v479
        %481 = vmatmul.bf16.gmra.mxu0 %v329
        %v482 = vpop.f32.mrf.mxu0
        %v483 = vadd.f32 %v352, %v482
        %v484 = vpop.f32.mrf.mxu0
        %v485 = vadd.f32 %v352, %v484
        %486 = vmatmul.bf16.gmra.mxu0 %v330
        %v487 = vpop.f32.mrf.mxu0
        %v488 = vadd.f32 %v352, %v487
        %v489 = vpop.f32.mrf.mxu0
        %v490 = vadd.f32 %v352, %v489
        %491 = vmatmul.bf16.gmra.mxu0 %v331
        %v492 = vpop.f32.mrf.mxu0
        %v493 = vadd.f32 %v352, %v492
        %v494 = vpop.f32.mrf.mxu0
        %v495 = vadd.f32 %v352, %v494
        %496 = vmatmul.bf16.gmra.mxu0 %v332
        %v497 = vpop.f32.mrf.mxu0
        %v498 = vadd.f32 %v352, %v497
        %v499 = vpop.f32.mrf.mxu0
        %500 = vdwg.mxu0
        %501 = vst [vmem:[%s304] sm:$0xff] %v445
        %502 = vst [vmem:[%s304 + $0x8] sm:$0xff] %v478
        %503 = vst [vmem:[%s304 + $0x10] sm:$0xff] %v447
        %504 = vst [vmem:[%s304 + $0x18] sm:$0xff] %v480
        %505 = vst [vmem:[%s304 + $0x20] sm:$0xff] %v450
        %506 = vst [vmem:[%s304 + $0x28] sm:$0xff] %v483
        %507 = vst [vmem:[%s304 + $0x30] sm:$0xff] %v452
        %508 = vst [vmem:[%s304 + $0x38] sm:$0xff] %v485
        %509 = vst [vmem:[%s304 + $0x40] sm:$0xff] %v455
        %510 = vst [vmem:[%s304 + $0x48] sm:$0xff] %v488
        %511 = vst [vmem:[%s304 + $0x50] sm:$0xff] %v457
        %512 = vst [vmem:[%s304 + $0x58] sm:$0xff] %v490
        %513 = vst [vmem:[%s304 + $0x60] sm:$0xff] %v460
        %514 = vst [vmem:[%s304 + $0x68] sm:$0xff] %v493
        %515 = vst [vmem:[%s304 + $0x70] sm:$0xff] %v462
        %516 = vst [vmem:[%s304 + $0x78] sm:$0xff] %v495
        %517 = vst [vmem:[%s304 + $0x80] sm:$0xff] %v465
        %518 = vst [vmem:[%s304 + $0x88] sm:$0xff] %v498
        %s519 = sand.u32 %s114, 1
        %s520 = sand.u32 %s114, 1
        %s521 = smul.addr %s520, 144
        %s522 = scalar_lea.vmem [#allocation3], %s521
        // Predicated region
        $region71: #{our_model_forward.7} parent=65 // pred_check
          %p523 = pneg %p124
        $region72: #{our_model_forward.7} parent=65 // pred_check_branch
          %525 = sbr.rel (%p523) target = $region74
        $region73: #{our_model_forward.7} parent=65 // pred_region
          %s526 = smul.u32 9, %s18
          %s527 = smul.u32 2, %s19
          %s528 = smul.addr %s526, 4
          %s529 = sadd.s32 %s527, %s528
          %s530 = smul.addr %s529, 8
          %s531 = scalar_lea.vmem %s3, %s530
          // Predicated region
          $region75: #{our_model_forward.7} parent=73 // pred_check
            _
          $region76: #{our_model_forward.7} parent=73 // pred_check_branch
            %533 = sbr.rel (0) target = $region78
          $region77: #{our_model_forward.7} parent=73 // pred_region
            // Predicated region
            $region79: #{our_model_forward.7} parent=77 // pred_check
              _
            $region80: #{our_model_forward.7} parent=77 // pred_check_branch
              %535 = sbr.rel (0) target = $region82
            $region81: #{our_model_forward.7} parent=77 // pred_region
              loop: start=0, step=1, limit=1
              $region83: #{our_model_forward.7} parent=81 // loop_pre_header
                _
              $region84: #{our_model_forward.7} parent=81 // loop_header
                %s537 = sphi 0, %s541
                %p538 = scmp.ge.s32.totalorder %s537, 1
                %s542 = sphi %s522, %s522
                %s543 = sphi %s531, %s531
              $region85: #{our_model_forward.7} parent=81 // loop_header_branch
                %540 = sbr.rel (%p538) target = $region89
              $region86: #{our_model_forward.7} parent=81 // loop_body
                %v544 = vld [vmem:[%s542] sm:$0xff]
                %545 = vst [vmem:[%s543] sm:$0xff] %v544
                %v546 = vld [vmem:[%s542 + $0x8] sm:$0xff]
                %547 = vst [vmem:[%s543 + $0x8] sm:$0xff] %v546
                %v548 = vld [vmem:[%s542 + $0x10] sm:$0xff]
                %549 = vst [vmem:[%s543 + $0x20] sm:$0xff] %v548
                %v550 = vld [vmem:[%s542 + $0x18] sm:$0xff]
                %551 = vst [vmem:[%s543 + $0x28] sm:$0xff] %v550
                %v552 = vld [vmem:[%s542 + $0x20] sm:$0xff]
                %553 = vst [vmem:[%s543 + $0x40] sm:$0xff] %v552
                %v554 = vld [vmem:[%s542 + $0x28] sm:$0xff]
                %555 = vst [vmem:[%s543 + $0x48] sm:$0xff] %v554
                %v556 = vld [vmem:[%s542 + $0x30] sm:$0xff]
                %557 = vst [vmem:[%s543 + $0x60] sm:$0xff] %v556
                %v558 = vld [vmem:[%s542 + $0x38] sm:$0xff]
                %559 = vst [vmem:[%s543 + $0x68] sm:$0xff] %v558
                %v560 = vld [vmem:[%s542 + $0x40] sm:$0xff]
                %561 = vst [vmem:[%s543 + $0x80] sm:$0xff] %v560
                %v562 = vld [vmem:[%s542 + $0x48] sm:$0xff]
                %563 = vst [vmem:[%s543 + $0x88] sm:$0xff] %v562
                %v564 = vld [vmem:[%s542 + $0x50] sm:$0xff]
                %565 = vst [vmem:[%s543 + $0xa0] sm:$0xff] %v564
                %v566 = vld [vmem:[%s542 + $0x58] sm:$0xff]
                %567 = vst [vmem:[%s543 + $0xa8] sm:$0xff] %v566
                %v568 = vld [vmem:[%s542 + $0x60] sm:$0xff]
                %569 = vst [vmem:[%s543 + $0xc0] sm:$0xff] %v568
                %v570 = vld [vmem:[%s542 + $0x68] sm:$0xff]
                %571 = vst [vmem:[%s543 + $0xc8] sm:$0xff] %v570
                %v572 = vld [vmem:[%s542 + $0x70] sm:$0xff]
                %573 = vst [vmem:[%s543 + $0xe0] sm:$0xff] %v572
                %v574 = vld [vmem:[%s542 + $0x78] sm:$0xff]
                %575 = vst [vmem:[%s543 + $0xe8] sm:$0xff] %v574
                %v576 = vld [vmem:[%s542 + $0x80] sm:$0xff]
                %577 = vst [vmem:[%s543 + $0x100] sm:$0xff] %v576
                %v578 = vld [vmem:[%s542 + $0x88] sm:$0xff]
                %579 = vst [vmem:[%s543 + $0x108] sm:$0xff] %v578
              $region87: #{our_model_forward.7} parent=81 // loop_footer
                %s541 = sadd.s32 1, %s537
              $region88: #{our_model_forward.7} parent=81 // loop_footer_branch
                %536 = sbr.rel target = $region84
              $region89: #{our_model_forward.7} parent=81 // loop_exit
                _
            $region82: #{our_model_forward.7} parent=77 // pred_fallthru
              _
            // Predicated region
            $region90: #{our_model_forward.7} parent=77 // pred_check
              _
            $region91: #{our_model_forward.7} parent=77 // pred_check_branch
              %581 = sbr.rel target = $region93
            $region92: #{our_model_forward.7} parent=77 // pred_region
              _
            $region93: #{our_model_forward.7} parent=77 // pred_fallthru
              _
          $region78: #{our_model_forward.7} parent=73 // pred_fallthru
            _
          %582 = vnop
        $region74: #{our_model_forward.7} parent=65 // pred_fallthru
          _
      $region66: #{our_model_forward.7} parent=5 // pred_fallthru
        _
      %p583 = scmp.le.s32.totalorder 2, %s9
      // Predicated region
      $region94: #{our_model_forward.7} parent=5 // pred_check
        %p584 = pneg %p583
      $region95: #{our_model_forward.7} parent=5 // pred_check_branch
        %586 = sbr.rel (%p584) target = $region97
      $region96: #{our_model_forward.7} parent=5 // pred_region
        %s587 = ssub.s32 %s9, 2
        // Predicated region
        $region98: #{our_model_forward.7} parent=96 // pred_check
          %p588 = pneg %p130
        $region99: #{our_model_forward.7} parent=96 // pred_check_branch
          %590 = sbr.rel (%p588) target = $region101
        $region100: #{our_model_forward.7} parent=96 // pred_region
          %s591 = sand.u32 %s115, 1
          %s592 = sand.u32 %s115, 1
          %s593 = smul.addr %s592, 144
          %s594 = scalar_lea.vmem [#allocation3], %s593
        $region101: #{our_model_forward.7} parent=96 // pred_fallthru
          _
      $region97: #{our_model_forward.7} parent=5 // pred_fallthru
        _
    $region6: #{our_model_forward.7} parent=1 // loop_footer
      %s13 = sadd.s32 1, %s9
    $region7: #{our_model_forward.7} parent=1 // loop_footer_branch
      %8 = sbr.rel target = $region3
    $region8: #{our_model_forward.7} parent=1 // loop_exit
      _

// kernel: our_model_forward.11
$region0: #{our_model_forward.11}
  #allocation0 [shape = 'u32[]', space=smem, size = 0x4, offset = 0x4, fixed_abs, tag = 'smem constant byte address 0x4 - core index']
  #allocation1 [shape = 'u32[72,128]{1,0:T(1,128)}', space=vmem, size = 0x9000, scoped, tag = 'internal scratch']
  %s0 = inlined_call_operand.vmem [shape: f32[72,128], index: 0, kind: input, shape index: {}]
  %s1 = inlined_call_operand.vmem [shape: bf16[128,256], index: 1, kind: input, shape index: {}]
  %s2 = inlined_call_operand.vmem [shape: f32[1,256], index: 2, kind: input, shape index: {}]
  %s3 = inlined_call_operand.vmem [shape: f32[72,256], index: 3, kind: output, shape index: {}]
  %s4 = sld [smem:[#allocation0]]
  $region22: #{our_model_forward.11} parent=0
    _
  %s6 = ssub.s32 1, %s4
  %s7 = scalar_select 0, %s6, %s4
  // Predicated region
  $region2: #{our_model_forward.11} parent=0 // pred_check
    _
  $region3: #{our_model_forward.11} parent=0 // pred_check_branch
    %9 = sbr.rel (0) target = $region5
  $region4: #{our_model_forward.11} parent=0 // pred_region
    _
  $region5: #{our_model_forward.11} parent=0 // pred_fallthru
    _
  // Predicated region
  $region6: #{our_model_forward.11} parent=0 // pred_check
    _
  $region7: #{our_model_forward.11} parent=0 // pred_check_branch
    %11 = sbr.rel (0) target = $region9
  $region8: #{our_model_forward.11} parent=0 // pred_region
    _
  $region9: #{our_model_forward.11} parent=0 // pred_fallthru
    _
  // Predicated region
  $region10: #{our_model_forward.11} parent=0 // pred_check
    _
  $region11: #{our_model_forward.11} parent=0 // pred_check_branch
    %13 = sbr.rel (0) target = $region13
  $region12: #{our_model_forward.11} parent=0 // pred_region
    _
  $region13: #{our_model_forward.11} parent=0 // pred_fallthru
    _
  %v14 = vld [vmem:[%s0] sm:$0xff]
  %v15 = vld [vmem:[%s0 + $0x8] sm:$0xff]
  %v16 = vld [vmem:[%s0 + $0x10] sm:$0xff]
  %v17 = vld [vmem:[%s0 + $0x18] sm:$0xff]
  %v18 = vld [vmem:[%s0 + $0x20] sm:$0xff]
  %v19 = vld [vmem:[%s0 + $0x28] sm:$0xff]
  %v20 = vld [vmem:[%s0 + $0x30] sm:$0xff]
  %v21 = vld [vmem:[%s0 + $0x38] sm:$0xff]
  %v22 = vld [vmem:[%s0 + $0x40] sm:$0xff]
  %v23 = vpack.c.bf16 %v15, %v14
  %v24 = vpack.c.bf16 %v17, %v16
  %v25 = vpack.c.bf16 %v19, %v18
  %v26 = vpack.c.bf16 %v21, %v20
  %v27 = vpack.c.bf16 %v22, %v22
  %v28 = vld [vmem:[%s1] sm:$0xff]
  %v29 = vld [vmem:[%s1 + $0x8] sm:$0xff]
  %v30 = vld [vmem:[%s1 + $0x10] sm:$0xff]
  %v31 = vld [vmem:[%s1 + $0x18] sm:$0xff]
  %v32 = vld [vmem:[%s1 + $0x20] sm:$0xff]
  %v33 = vld [vmem:[%s1 + $0x28] sm:$0xff]
  %v34 = vld [vmem:[%s1 + $0x30] sm:$0xff]
  %v35 = vld [vmem:[%s1 + $0x38] sm:$0xff]
  %v36 = vld [vmem:[%s1 + $0x40] sm:$0xff]
  %v37 = vld [vmem:[%s1 + $0x48] sm:$0xff]
  %v38 = vld [vmem:[%s1 + $0x50] sm:$0xff]
  %v39 = vld [vmem:[%s1 + $0x58] sm:$0xff]
  %v40 = vld [vmem:[%s1 + $0x60] sm:$0xff]
  %v41 = vld [vmem:[%s1 + $0x68] sm:$0xff]
  %v42 = vld [vmem:[%s1 + $0x70] sm:$0xff]
  %v43 = vld [vmem:[%s1 + $0x78] sm:$0xff]
  %v44 = vld [vmem:[%s2] sm:$0x3]
  %v46 = vperm.slane %v44, 0
  %v47 = vperm.slane %v44, 1
  %v66 = vunpack.c.l.b16 %v28
  %v67 = vunpack.c.h.b16 %v28
  %v68 = vunpack.c.l.b16 %v29
  %v69 = vunpack.c.h.b16 %v29
  %v70 = vunpack.c.l.b16 %v30
  %v71 = vunpack.c.h.b16 %v30
  %v72 = vunpack.c.l.b16 %v31
  %v73 = vunpack.c.h.b16 %v31
  %v74 = vunpack.c.l.b16 %v32
  %v75 = vunpack.c.h.b16 %v32
  %v76 = vunpack.c.l.b16 %v33
  %v77 = vunpack.c.h.b16 %v33
  %v78 = vunpack.c.l.b16 %v34
  %v79 = vunpack.c.h.b16 %v34
  %v80 = vunpack.c.l.b16 %v35
  %v81 = vunpack.c.h.b16 %v35
  %v82 = vunpack.c.l.b16 %v36
  %v83 = vunpack.c.h.b16 %v36
  %v84 = vunpack.c.l.b16 %v37
  %v85 = vunpack.c.h.b16 %v37
  %v86 = vunpack.c.l.b16 %v38
  %v87 = vunpack.c.h.b16 %v38
  %v88 = vunpack.c.l.b16 %v39
  %v89 = vunpack.c.h.b16 %v39
  %v90 = vunpack.c.l.b16 %v40
  %v91 = vunpack.c.h.b16 %v40
  %v92 = vunpack.c.l.b16 %v41
  %v93 = vunpack.c.h.b16 %v41
  %v94 = vunpack.c.l.b16 %v42
  %v95 = vunpack.c.h.b16 %v42
  %v96 = vunpack.c.l.b16 %v43
  %v97 = vunpack.c.h.b16 %v43
  %v98 = vpack.c.b16 %v68, %v66
  %v99 = vpack.c.b16 %v69, %v67
  %v100 = vpack.c.b16 %v72, %v70
  %v101 = vpack.c.b16 %v73, %v71
  %v102 = vpack.c.b16 %v76, %v74
  %v103 = vpack.c.b16 %v77, %v75
  %v104 = vpack.c.b16 %v80, %v78
  %v105 = vpack.c.b16 %v81, %v79
  %v106 = vpack.c.b16 %v84, %v82
  %v107 = vpack.c.b16 %v85, %v83
  %v108 = vpack.c.b16 %v88, %v86
  %v109 = vpack.c.b16 %v89, %v87
  %v110 = vpack.c.b16 %v92, %v90
  %v111 = vpack.c.b16 %v93, %v91
  %v112 = vpack.c.b16 %v96, %v94
  %v113 = vpack.c.b16 %v97, %v95
  %130 = vmatpush.bf16.msra.mxu0 %v112
  %131 = vmatpush.bf16.msra.mxu0 %v110
  %132 = vmatpush.bf16.msra.mxu0 %v108
  %133 = vmatpush.bf16.msra.mxu0 %v106
  %134 = vmatpush.bf16.msra.mxu0 %v104
  %135 = vmatpush.bf16.msra.mxu0 %v102
  %136 = vmatpush.bf16.msra.mxu0 %v100
  %137 = vmatpush.bf16.msra.mxu0 %v98
  %138 = vmatmul.bf16.gmra.mxu0 %v23
  %v139 = vpop.f32.mrf.mxu0
  %v140 = vadd.f32 %v46, %v139
  %v141 = vpop.f32.mrf.mxu0
  %v142 = vadd.f32 %v46, %v141
  %143 = vmatmul.bf16.gmra.mxu0 %v24
  %v144 = vpop.f32.mrf.mxu0
  %v145 = vadd.f32 %v46, %v144
  %v146 = vpop.f32.mrf.mxu0
  %v147 = vadd.f32 %v46, %v146
  %148 = vmatmul.bf16.gmra.mxu0 %v25
  %v149 = vpop.f32.mrf.mxu0
  %v150 = vadd.f32 %v46, %v149
  %v151 = vpop.f32.mrf.mxu0
  %v152 = vadd.f32 %v46, %v151
  %153 = vmatmul.bf16.gmra.mxu0 %v26
  %v154 = vpop.f32.mrf.mxu0
  %v155 = vadd.f32 %v46, %v154
  %v156 = vpop.f32.mrf.mxu0
  %v157 = vadd.f32 %v46, %v156
  %158 = vmatmul.bf16.gmra.mxu0 %v27
  %v159 = vpop.f32.mrf.mxu0
  %v160 = vadd.f32 %v46, %v159
  %v161 = vpop.f32.mrf.mxu0
  %162 = vdwg.mxu0
  %163 = vmatpush.bf16.msra.mxu0 %v113
  %164 = vmatpush.bf16.msra.mxu0 %v111
  %165 = vmatpush.bf16.msra.mxu0 %v109
  %166 = vmatpush.bf16.msra.mxu0 %v107
  %167 = vmatpush.bf16.msra.mxu0 %v105
  %168 = vmatpush.bf16.msra.mxu0 %v103
  %169 = vmatpush.bf16.msra.mxu0 %v101
  %170 = vmatpush.bf16.msra.mxu0 %v99
  %171 = vmatmul.bf16.gmra.mxu0 %v23
  %v172 = vpop.f32.mrf.mxu0
  %v173 = vadd.f32 %v47, %v172
  %v174 = vpop.f32.mrf.mxu0
  %v175 = vadd.f32 %v47, %v174
  %176 = vmatmul.bf16.gmra.mxu0 %v24
  %v177 = vpop.f32.mrf.mxu0
  %v178 = vadd.f32 %v47, %v177
  %v179 = vpop.f32.mrf.mxu0
  %v180 = vadd.f32 %v47, %v179
  %181 = vmatmul.bf16.gmra.mxu0 %v25
  %v182 = vpop.f32.mrf.mxu0
  %v183 = vadd.f32 %v47, %v182
  %v184 = vpop.f32.mrf.mxu0
  %v185 = vadd.f32 %v47, %v184
  %186 = vmatmul.bf16.gmra.mxu0 %v26
  %v187 = vpop.f32.mrf.mxu0
  %v188 = vadd.f32 %v47, %v187
  %v189 = vpop.f32.mrf.mxu0
  %v190 = vadd.f32 %v47, %v189
  %191 = vmatmul.bf16.gmra.mxu0 %v27
  %v192 = vpop.f32.mrf.mxu0
  %v193 = vadd.f32 %v47, %v192
  %v194 = vpop.f32.mrf.mxu0
  %195 = vdwg.mxu0
  %196 = vst [vmem:[%s3] sm:$0xff] %v140
  %197 = vst [vmem:[%s3 + $0x8] sm:$0xff] %v173
  %198 = vst [vmem:[%s3 + $0x10] sm:$0xff] %v142
  %199 = vst [vmem:[%s3 + $0x18] sm:$0xff] %v175
  %200 = vst [vmem:[%s3 + $0x20] sm:$0xff] %v145
  %201 = vst [vmem:[%s3 + $0x28] sm:$0xff] %v178
  %202 = vst [vmem:[%s3 + $0x30] sm:$0xff] %v147
  %203 = vst [vmem:[%s3 + $0x38] sm:$0xff] %v180
  %204 = vst [vmem:[%s3 + $0x40] sm:$0xff] %v150
  %205 = vst [vmem:[%s3 + $0x48] sm:$0xff] %v183
  %206 = vst [vmem:[%s3 + $0x50] sm:$0xff] %v152
  %207 = vst [vmem:[%s3 + $0x58] sm:$0xff] %v185
  %208 = vst [vmem:[%s3 + $0x60] sm:$0xff] %v155
  %209 = vst [vmem:[%s3 + $0x68] sm:$0xff] %v188
  %210 = vst [vmem:[%s3 + $0x70] sm:$0xff] %v157
  %211 = vst [vmem:[%s3 + $0x78] sm:$0xff] %v190
  %212 = vst [vmem:[%s3 + $0x80] sm:$0xff] %v160
  %213 = vst [vmem:[%s3 + $0x88] sm:$0xff] %v193
  // Predicated region
  $region14: #{our_model_forward.11} parent=0 // pred_check
    _
  $region15: #{our_model_forward.11} parent=0 // pred_check_branch
    %215 = sbr.rel (0) target = $region17
  $region16: #{our_model_forward.11} parent=0 // pred_region
    _
  $region17: #{our_model_forward.11} parent=0 // pred_fallthru
    _
  // Predicated region
  $region18: #{our_model_forward.11} parent=0 // pred_check
    _
  $region19: #{our_model_forward.11} parent=0 // pred_check_branch
    %217 = sbr.rel (0) target = $region21
  $region20: #{our_model_forward.11} parent=0 // pred_region
    _
  $region21: #{our_model_forward.11} parent=0 // pred_fallthru
    _

// kernel: our_model_forward.8
$region0: #{our_model_forward.8}
  #allocation0 [shape = 'u32[]', space=smem, size = 0x4, offset = 0x4, fixed_abs, tag = 'smem constant byte address 0x4 - core index']
  #allocation1 [shape = 'u32[72,128]{1,0:T(1,128)}', space=vmem, size = 0x9000, scoped, tag = 'internal scratch']
  #allocation2 [shape = 'f32[8,128]{1,0:T(8,128)}', space=vmem, size = 0x1000, scoped, tag = 'scratch operand']
  #allocation3 [shape = 'f32[8,128]{1,0:T(8,128)}', space=vmem, size = 0x1000, scoped, tag = 'scratch operand']
  %s0 = inlined_call_operand.vmem [shape: f32[9,8,512], index: 0, kind: input, shape index: {}]
  %s1 = inlined_call_operand.vmem [shape: bf16[128,512], index: 1, kind: input, shape index: {}]
  %s2 = inlined_call_operand.vmem [shape: f32[9,8,128], index: 2, kind: output, shape index: {}]
  %s3 = sld [smem:[#allocation0]]
  $region45: #{our_model_forward.8} parent=0
    _
  %s5 = ssub.s32 1, %s3
  %s6 = scalar_select 0, %s5, %s3
  loop: start=0, step=1, limit=11
  $region2: #{our_model_forward.8} parent=0 // loop_pre_header
    _
  $region3: #{our_model_forward.8} parent=0 // loop_header
    %s8 = sphi 0, %s12
    %p9 = scmp.ge.s32.totalorder %s8, 11
    %s18 = sphi 0, %s20
    %s21 = sphi 0, %s18
    %s22 = sphi 0, %s21
    %s38 = sphi 0, %s22
    %s42 = sphi 0, %s42
    %s44 = sphi 0, %s42
    %s45 = sphi 0, %s44
    %s59 = sphi 0, %s45
    %s65 = sphi 0, %s67
    %s68 = sphi 0, %s65
    %s69 = sphi 0, %s68
    %s85 = sphi 0, %s69
  $region4: #{our_model_forward.8} parent=0 // loop_header_branch
    %11 = sbr.rel (%p9) target = $region8
  $region5: #{our_model_forward.8} parent=0 // loop_body
    %s13 = ssub.s32 %s8, 1
    %s14 = ssub.s32 %s8, 2
    %s15 = sadd.s32 %s8, 1
    %s16 = ssub.s32 %s8, %s15
    %p17 = scmp.eq.s32.totalorder %s16, 0
    %s19 = sadd.s32 %s18, 1
    %s20 = scalar_select %p17, %s18, %s19
    %p23 = pneg %p17
    %p24 = scmp.eq.s32.totalorder %s8, 8
    %p25 = por %p23, %p24
    %p26 = scmp.ne.s32.totalorder %s18, %s21
    %p27 = scmp.eq.s32.totalorder %s8, 0
    %p28 = por %p26, %p27
    %p29 = scmp.ne.s32.totalorder %s18, %s21
    %p30 = scmp.eq.s32.totalorder %s13, 8
    %p31 = por %p29, %p30
    %p32 = scmp.ne.s32.totalorder %s21, %s22
    %p33 = scmp.eq.s32.totalorder %s13, 0
    %p34 = por %p32, %p33
    %p35 = scmp.ne.s32.totalorder %s21, %s22
    %p36 = scmp.eq.s32.totalorder %s14, 8
    %p37 = por %p35, %p36
    %p39 = scmp.ne.s32.totalorder %s22, %s38
    %p40 = scmp.eq.s32.totalorder %s14, 0
    %p41 = por %p39, %p40
    %s43 = sadd.s32 %s42, 1
    %p46 = scmp.eq.s32.totalorder %s8, 8
    %p47 = scmp.ne.s32.totalorder %s42, %s44
    %p48 = scmp.eq.s32.totalorder %s8, 0
    %p49 = por %p47, %p48
    %p50 = scmp.ne.s32.totalorder %s42, %s44
    %p51 = scmp.eq.s32.totalorder %s13, 8
    %p52 = por %p50, %p51
    %p53 = scmp.ne.s32.totalorder %s44, %s45
    %p54 = scmp.eq.s32.totalorder %s13, 0
    %p55 = por %p53, %p54
    %p56 = scmp.ne.s32.totalorder %s44, %s45
    %p57 = scmp.eq.s32.totalorder %s14, 8
    %p58 = por %p56, %p57
    %p60 = scmp.ne.s32.totalorder %s45, %s59
    %p61 = scmp.eq.s32.totalorder %s14, 0
    %p62 = por %p60, %p61
    %s63 = ssub.s32 %s8, %s15
    %p64 = scmp.eq.s32.totalorder %s63, 0
    %s66 = sadd.s32 %s65, 1
    %s67 = scalar_select %p64, %s65, %s66
    %p70 = pneg %p64
    %p71 = scmp.eq.s32.totalorder %s8, 8
    %p72 = por %p70, %p71
    %p73 = scmp.ne.s32.totalorder %s65, %s68
    %p74 = scmp.eq.s32.totalorder %s8, 0
    %p75 = por %p73, %p74
    %p76 = scmp.ne.s32.totalorder %s65, %s68
    %p77 = scmp.eq.s32.totalorder %s13, 8
    %p78 = por %p76, %p77
    %p79 = scmp.ne.s32.totalorder %s68, %s69
    %p80 = scmp.eq.s32.totalorder %s13, 0
    %p81 = por %p79, %p80
    %p82 = scmp.ne.s32.totalorder %s68, %s69
    %p83 = scmp.eq.s32.totalorder %s14, 8
    %p84 = por %p82, %p83
    %p86 = scmp.ne.s32.totalorder %s69, %s85
    %p87 = scmp.eq.s32.totalorder %s14, 0
    %p88 = por %p86, %p87
    %p89 = scmp.le.s32.totalorder 1, %s8
    %p90 = scmp.lt.s32.totalorder %s8, 10
    %p91 = pnand %p89, %p90
    %p92 = pneg %p91
    // Predicated region
    $region9: #{our_model_forward.8} parent=5 // pred_check
      _
    $region10: #{our_model_forward.8} parent=5 // pred_check_branch
      %94 = sbr.rel (%p91) target = $region12
    $region11: #{our_model_forward.8} parent=5 // pred_region
      %s95 = ssub.s32 %s8, 1
      // Predicated region
      $region13: #{our_model_forward.8} parent=11 // pred_check
        %p96 = pneg %p55
      $region14: #{our_model_forward.8} parent=11 // pred_check_branch
        %98 = sbr.rel (%p96) target = $region16
      $region15: #{our_model_forward.8} parent=11 // pred_region
        _
      $region16: #{our_model_forward.8} parent=11 // pred_fallthru
        _
    $region12: #{our_model_forward.8} parent=5 // pred_fallthru
      _
    %p99 = scmp.lt.s32.totalorder %s8, 9
    // Predicated region
    $region17: #{our_model_forward.8} parent=5 // pred_check
      %p100 = pneg %p99
    $region18: #{our_model_forward.8} parent=5 // pred_check_branch
      %102 = sbr.rel (%p100) target = $region20
    $region19: #{our_model_forward.8} parent=5 // pred_region
      // Predicated region
      $region21: #{our_model_forward.8} parent=19 // pred_check
        %p103 = pneg %p28
      $region22: #{our_model_forward.8} parent=19 // pred_check_branch
        %105 = sbr.rel (%p103) target = $region24
      $region23: #{our_model_forward.8} parent=19 // pred_region
        %p106 = scmp.lt.s32.totalorder %s8, 8
        %s107 = scalar_select %p106, %s8, 8
        %s108 = smul.addr %s107, 4
        %s109 = smul.addr %s108, 8
        %s110 = scalar_lea.vmem %s0, %s109
      $region24: #{our_model_forward.8} parent=19 // pred_fallthru
        _
    $region20: #{our_model_forward.8} parent=5 // pred_fallthru
      _
    %p111 = scmp.le.s32.totalorder 1, %s8
    %p112 = scmp.lt.s32.totalorder %s8, 10
    %p113 = pnand %p111, %p112
    %p114 = pneg %p113
    // Predicated region
    $region25: #{our_model_forward.8} parent=5 // pred_check
      _
    $region26: #{our_model_forward.8} parent=5 // pred_check_branch
      %116 = sbr.rel (%p113) target = $region28
    $region27: #{our_model_forward.8} parent=5 // pred_region
      %s117 = ssub.s32 %s8, 1
      %p118 = scmp.lt.s32.totalorder %s13, 8
      %s119 = scalar_select %p118, %s13, 8
      %s120 = smul.addr %s119, 4
      %s121 = smul.addr %s120, 8
      %s122 = scalar_lea.vmem %s0, %s121
      %p123 = pneg %p34
      %p124 = pneg %p31
      %p125 = pneg %p55
      %p126 = pneg %p52
      %p127 = pneg %p81
      %p128 = pneg %p78
      %p129 = scmp.lt.s32.totalorder %s13, 8
      %s130 = scalar_select %p129, %s13, 8
      %s131 = smul.addr %s130, 8
      %s132 = scalar_lea.vmem %s2, %s131
      %p133 = scmp.lt.s32.totalorder %s13, 8
      %s134 = scalar_select %p133, %s13, 8
      %s135 = smul.addr %s134, 4
      %s136 = smul.addr %s135, 8
      %s137 = scalar_lea.vmem %s0, %s136
      %p138 = scmp.lt.s32.totalorder %s13, 8
      %s139 = scalar_select %p138, %s13, 8
      %s140 = smul.addr %s139, 8
      %s141 = scalar_lea.vmem %s2, %s140
      %p142 = scmp.eq.s32.totalorder %s13, 0
      // Predicated region
      $region29: #{our_model_forward.8} parent=27 // pred_check
        %p143 = pneg %p142
      $region30: #{our_model_forward.8} parent=27 // pred_check_branch
        %145 = sbr.rel (%p143) target = $region32
      $region31: #{our_model_forward.8} parent=27 // pred_region
        %146 = vst [vmem:[#allocation2] sm:$0xff] 0.0
        %147 = vst [vmem:[#allocation3] sm:$0xff] 0.0
      $region32: #{our_model_forward.8} parent=27 // pred_fallthru
        _
      %v148 = vld [vmem:[%s137] sm:$0xff]
      %v149 = vld [vmem:[%s137 + $0x8] sm:$0xff]
      %v150 = vld [vmem:[%s137 + $0x10] sm:$0xff]
      %v151 = vld [vmem:[%s137 + $0x18] sm:$0xff]
      %v152 = vld [vmem:[#allocation2] sm:$0xff]
      %v153 = vpack.c.bf16 %v152, %v152
      %v154 = vld [vmem:[%s1] sm:$0xff]
      %v155 = vld [vmem:[%s1 + $0x8] sm:$0xff]
      %v156 = vld [vmem:[%s1 + $0x10] sm:$0xff]
      %v157 = vld [vmem:[%s1 + $0x18] sm:$0xff]
      %v158 = vld [vmem:[%s1 + $0x20] sm:$0xff]
      %v159 = vld [vmem:[%s1 + $0x28] sm:$0xff]
      %v160 = vld [vmem:[%s1 + $0x30] sm:$0xff]
      %v161 = vld [vmem:[%s1 + $0x38] sm:$0xff]
      %v162 = vld [vmem:[%s1 + $0x40] sm:$0xff]
      %v163 = vld [vmem:[%s1 + $0x48] sm:$0xff]
      %v164 = vld [vmem:[%s1 + $0x50] sm:$0xff]
      %v165 = vld [vmem:[%s1 + $0x58] sm:$0xff]
      %v166 = vld [vmem:[%s1 + $0x60] sm:$0xff]
      %v167 = vld [vmem:[%s1 + $0x68] sm:$0xff]
      %v168 = vld [vmem:[%s1 + $0x70] sm:$0xff]
      %v169 = vld [vmem:[%s1 + $0x78] sm:$0xff]
      %v170 = vld [vmem:[%s1 + $0x80] sm:$0xff]
      %v171 = vld [vmem:[%s1 + $0x88] sm:$0xff]
      %v172 = vld [vmem:[%s1 + $0x90] sm:$0xff]
      %v173 = vld [vmem:[%s1 + $0x98] sm:$0xff]
      %v174 = vld [vmem:[%s1 + $0xa0] sm:$0xff]
      %v175 = vld [vmem:[%s1 + $0xa8] sm:$0xff]
      %v176 = vld [vmem:[%s1 + $0xb0] sm:$0xff]
      %v177 = vld [vmem:[%s1 + $0xb8] sm:$0xff]
      %v178 = vld [vmem:[%s1 + $0xc0] sm:$0xff]
      %v179 = vld [vmem:[%s1 + $0xc8] sm:$0xff]
      %v180 = vld [vmem:[%s1 + $0xd0] sm:$0xff]
      %v181 = vld [vmem:[%s1 + $0xd8] sm:$0xff]
      %v182 = vld [vmem:[%s1 + $0xe0] sm:$0xff]
      %v183 = vld [vmem:[%s1 + $0xe8] sm:$0xff]
      %v184 = vld [vmem:[%s1 + $0xf0] sm:$0xff]
      %v185 = vld [vmem:[%s1 + $0xf8] sm:$0xff]
      %v218 = vunpack.c.l.b16 %v154
      %v219 = vunpack.c.h.b16 %v154
      %v220 = vunpack.c.l.b16 %v155
      %v221 = vunpack.c.h.b16 %v155
      %v222 = vunpack.c.l.b16 %v156
      %v223 = vunpack.c.h.b16 %v156
      %v224 = vunpack.c.l.b16 %v157
      %v225 = vunpack.c.h.b16 %v157
      %v226 = vunpack.c.l.b16 %v158
      %v227 = vunpack.c.h.b16 %v158
      %v228 = vunpack.c.l.b16 %v159
      %v229 = vunpack.c.h.b16 %v159
      %v230 = vunpack.c.l.b16 %v160
      %v231 = vunpack.c.h.b16 %v160
      %v232 = vunpack.c.l.b16 %v161
      %v233 = vunpack.c.h.b16 %v161
      %v234 = vunpack.c.l.b16 %v162
      %v235 = vunpack.c.h.b16 %v162
      %v236 = vunpack.c.l.b16 %v163
      %v237 = vunpack.c.h.b16 %v163
      %v238 = vunpack.c.l.b16 %v164
      %v239 = vunpack.c.h.b16 %v164
      %v240 = vunpack.c.l.b16 %v165
      %v241 = vunpack.c.h.b16 %v165
      %v242 = vunpack.c.l.b16 %v166
      %v243 = vunpack.c.h.b16 %v166
      %v244 = vunpack.c.l.b16 %v167
      %v245 = vunpack.c.h.b16 %v167
      %v246 = vunpack.c.l.b16 %v168
      %v247 = vunpack.c.h.b16 %v168
      %v248 = vunpack.c.l.b16 %v169
      %v249 = vunpack.c.h.b16 %v169
      %v250 = vunpack.c.l.b16 %v170
      %v251 = vunpack.c.h.b16 %v170
      %v252 = vunpack.c.l.b16 %v171
      %v253 = vunpack.c.h.b16 %v171
      %v254 = vunpack.c.l.b16 %v172
      %v255 = vunpack.c.h.b16 %v172
      %v256 = vunpack.c.l.b16 %v173
      %v257 = vunpack.c.h.b16 %v173
      %v258 = vunpack.c.l.b16 %v174
      %v259 = vunpack.c.h.b16 %v174
      %v260 = vunpack.c.l.b16 %v175
      %v261 = vunpack.c.h.b16 %v175
      %v262 = vunpack.c.l.b16 %v176
      %v263 = vunpack.c.h.b16 %v176
      %v264 = vunpack.c.l.b16 %v177
      %v265 = vunpack.c.h.b16 %v177
      %v266 = vunpack.c.l.b16 %v178
      %v267 = vunpack.c.h.b16 %v178
      %v268 = vunpack.c.l.b16 %v179
      %v269 = vunpack.c.h.b16 %v179
      %v270 = vunpack.c.l.b16 %v180
      %v271 = vunpack.c.h.b16 %v180
      %v272 = vunpack.c.l.b16 %v181
      %v273 = vunpack.c.h.b16 %v181
      %v274 = vunpack.c.l.b16 %v182
      %v275 = vunpack.c.h.b16 %v182
      %v276 = vunpack.c.l.b16 %v183
      %v277 = vunpack.c.h.b16 %v183
      %v278 = vunpack.c.l.b16 %v184
      %v279 = vunpack.c.h.b16 %v184
      %v280 = vunpack.c.l.b16 %v185
      %v281 = vunpack.c.h.b16 %v185
      %v282 = vpack.c.b16 %v222, %v218
      %v283 = vpack.c.b16 %v223, %v219
      %v284 = vpack.c.b16 %v224, %v220
      %v285 = vpack.c.b16 %v225, %v221
      %v286 = vpack.c.b16 %v230, %v226
      %v287 = vpack.c.b16 %v231, %v227
      %v288 = vpack.c.b16 %v232, %v228
      %v289 = vpack.c.b16 %v233, %v229
      %v290 = vpack.c.b16 %v238, %v234
      %v291 = vpack.c.b16 %v239, %v235
      %v292 = vpack.c.b16 %v240, %v236
      %v293 = vpack.c.b16 %v241, %v237
      %v294 = vpack.c.b16 %v246, %v242
      %v295 = vpack.c.b16 %v247, %v243
      %v296 = vpack.c.b16 %v248, %v244
      %v297 = vpack.c.b16 %v249, %v245
      %v298 = vpack.c.b16 %v254, %v250
      %v299 = vpack.c.b16 %v255, %v251
      %v300 = vpack.c.b16 %v256, %v252
      %v301 = vpack.c.b16 %v257, %v253
      %v302 = vpack.c.b16 %v262, %v258
      %v303 = vpack.c.b16 %v263, %v259
      %v304 = vpack.c.b16 %v264, %v260
      %v305 = vpack.c.b16 %v265, %v261
      %v306 = vpack.c.b16 %v270, %v266
      %v307 = vpack.c.b16 %v271, %v267
      %v308 = vpack.c.b16 %v272, %v268
      %v309 = vpack.c.b16 %v273, %v269
      %v310 = vpack.c.b16 %v278, %v274
      %v311 = vpack.c.b16 %v279, %v275
      %v312 = vpack.c.b16 %v280, %v276
      %v313 = vpack.c.b16 %v281, %v277
      %346 = vmatpush.bf16.msra.mxu0 %v310
      %347 = vmatpush.bf16.msra.mxu0 %v306
      %348 = vmatpush.bf16.msra.mxu0 %v302
      %349 = vmatpush.bf16.msra.mxu0 %v298
      %350 = vmatpush.bf16.msra.mxu0 %v294
      %351 = vmatpush.bf16.msra.mxu0 %v290
      %352 = vmatpush.bf16.msra.mxu0 %v286
      %353 = vmatpush.bf16.msra.mxu0 %v282
      %354 = vmatmul.bf16.gmra.mxu0 %v153
      %v355 = vpop.f32.mrf.mxu0
      %v356 = vadd.f32 0.0, %v355
      %v357 = vpop.f32.mrf.mxu0
      %358 = vdwg.mxu0
      %359 = vmatpush.bf16.msra.mxu0 %v311
      %360 = vmatpush.bf16.msra.mxu0 %v307
      %361 = vmatpush.bf16.msra.mxu0 %v303
      %362 = vmatpush.bf16.msra.mxu0 %v299
      %363 = vmatpush.bf16.msra.mxu0 %v295
      %364 = vmatpush.bf16.msra.mxu0 %v291
      %365 = vmatpush.bf16.msra.mxu0 %v287
      %366 = vmatpush.bf16.msra.mxu0 %v283
      %367 = vmatmul.bf16.gmra.mxu0 %v153
      %v368 = vpop.f32.mrf.mxu0
      %v369 = vadd.f32 0.0, %v368
      %v370 = vpop.f32.mrf.mxu0
      %371 = vdwg.mxu0
      %372 = vmatpush.bf16.msra.mxu0 %v312
      %373 = vmatpush.bf16.msra.mxu0 %v308
      %374 = vmatpush.bf16.msra.mxu0 %v304
      %375 = vmatpush.bf16.msra.mxu0 %v300
      %376 = vmatpush.bf16.msra.mxu0 %v296
      %377 = vmatpush.bf16.msra.mxu0 %v292
      %378 = vmatpush.bf16.msra.mxu0 %v288
      %379 = vmatpush.bf16.msra.mxu0 %v284
      %380 = vmatmul.bf16.gmra.mxu0 %v153
      %v381 = vpop.f32.mrf.mxu0
      %v382 = vadd.f32 0.0, %v381
      %v383 = vpop.f32.mrf.mxu0
      %384 = vdwg.mxu0
      %385 = vmatpush.bf16.msra.mxu0 %v313
      %386 = vmatpush.bf16.msra.mxu0 %v309
      %387 = vmatpush.bf16.msra.mxu0 %v305
      %388 = vmatpush.bf16.msra.mxu0 %v301
      %389 = vmatpush.bf16.msra.mxu0 %v297
      %390 = vmatpush.bf16.msra.mxu0 %v293
      %391 = vmatpush.bf16.msra.mxu0 %v289
      %392 = vmatpush.bf16.msra.mxu0 %v285
      %393 = vmatmul.bf16.gmra.mxu0 %v153
      %v394 = vpop.f32.mrf.mxu0
      %v395 = vadd.f32 0.0, %v394
      %v396 = vpop.f32.mrf.mxu0
      %397 = vdwg.mxu0
      %v398 = vadd.f32 %v148, %v356
      %v399 = vadd.f32 %v149, %v369
      %v400 = vadd.f32 %v150, %v382
      %v401 = vadd.f32 %v151, %v395
      %v402 = vxor.u32 %v398, 2147483648
      %v403 = vmul.f32 %v402, 1.442695
      %v404 = vpow.pop %v403
      %v405 = vadd.f32 %v404, 1.0
      %v406 = vrcp.pop %v405
      %v407 = vmul.f32 %v405, %v406
      %v408 = vsub.f32 1.0, %v407
      %v409 = vmul.f32 %v406, %v408
      %v410 = vadd.f32 %v406, %v409
      %vm411 = vweird.f32 %v405
      %vm412 = vweird.f32 %v406
      %vm413 = vmor %vm411, %vm412
      %v414 = vsel %vm413, %v406, %v410
      %v415 = vand.u32 2147483647, %v405
      %vm416 = vcmp.eq.f32.partialorder %v415, 8.507059e+37
      %v417 = vand.u32 %v405, 2147483648
      %v418 = vor.u32 1.1754944e-38, %v417
      %v419 = vsel %vm416, %v418, %v414
      %v420 = vmul.f32 1.0, %v419
      %v421 = vxor.u32 %v399, 2147483648
      %v422 = vmul.f32 %v421, 1.442695
      %v423 = vpow.pop %v422
      %v424 = vadd.f32 %v423, 1.0
      %v425 = vrcp.pop %v424
      %v426 = vmul.f32 %v424, %v425
      %v427 = vsub.f32 1.0, %v426
      %v428 = vmul.f32 %v425, %v427
      %v429 = vadd.f32 %v425, %v428
      %vm430 = vweird.f32 %v424
      %vm431 = vweird.f32 %v425
      %vm432 = vmor %vm430, %vm431
      %v433 = vsel %vm432, %v425, %v429
      %v434 = vand.u32 2147483647, %v424
      %vm435 = vcmp.eq.f32.partialorder %v434, 8.507059e+37
      %v436 = vand.u32 %v424, 2147483648
      %v437 = vor.u32 1.1754944e-38, %v436
      %v438 = vsel %vm435, %v437, %v433
      %v439 = vmul.f32 1.0, %v438
      %v440 = vtanh.pop %v400
      %v441 = vxor.u32 %v401, 2147483648
      %v442 = vmul.f32 %v441, 1.442695
      %v443 = vpow.pop %v442
      %v444 = vadd.f32 %v443, 1.0
      %v445 = vrcp.pop %v444
      %v446 = vmul.f32 %v444, %v445
      %v447 = vsub.f32 1.0, %v446
      %v448 = vmul.f32 %v445, %v447
      %v449 = vadd.f32 %v445, %v448
      %vm450 = vweird.f32 %v444
      %vm451 = vweird.f32 %v445
      %vm452 = vmor %vm450, %vm451
      %v453 = vsel %vm452, %v445, %v449
      %v454 = vand.u32 2147483647, %v444
      %vm455 = vcmp.eq.f32.partialorder %v454, 8.507059e+37
      %v456 = vand.u32 %v444, 2147483648
      %v457 = vor.u32 1.1754944e-38, %v456
      %v458 = vsel %vm455, %v457, %v453
      %v459 = vmul.f32 1.0, %v458
      %v460 = vld [vmem:[#allocation3] sm:$0xff]
      %v461 = vmul.f32 %v439, %v460
      %v462 = vmul.f32 %v420, %v440
      %v463 = vadd.f32 %v461, %v462
      %v464 = vtanh.pop %v463
      %v465 = vmul.f32 %v459, %v464
      %466 = vst [vmem:[#allocation3] sm:$0xff] %v463
      %467 = vst [vmem:[#allocation2] sm:$0xff] %v465
      %468 = vst [vmem:[%s141] sm:$0xff] %v465
      %p469 = scmp.lt.s32.totalorder %s13, 8
      %s470 = scalar_select %p469, %s13, 8
      %s471 = smul.addr %s470, 8
      %s472 = scalar_lea.vmem %s2, %s471
      // Predicated region
      $region33: #{our_model_forward.8} parent=27 // pred_check
        %p473 = pneg %p78
      $region34: #{our_model_forward.8} parent=27 // pred_check_branch
        %475 = sbr.rel (%p473) target = $region36
      $region35: #{our_model_forward.8} parent=27 // pred_region
        _
      $region36: #{our_model_forward.8} parent=27 // pred_fallthru
        _
    $region28: #{our_model_forward.8} parent=5 // pred_fallthru
      _
    %p476 = scmp.le.s32.totalorder 2, %s8
    // Predicated region
    $region37: #{our_model_forward.8} parent=5 // pred_check
      %p477 = pneg %p476
    $region38: #{our_model_forward.8} parent=5 // pred_check_branch
      %479 = sbr.rel (%p477) target = $region40
    $region39: #{our_model_forward.8} parent=5 // pred_region
      %s480 = ssub.s32 %s8, 2
      // Predicated region
      $region41: #{our_model_forward.8} parent=39 // pred_check
        %p481 = pneg %p84
      $region42: #{our_model_forward.8} parent=39 // pred_check_branch
        %483 = sbr.rel (%p481) target = $region44
      $region43: #{our_model_forward.8} parent=39 // pred_region
        %p484 = scmp.lt.s32.totalorder %s14, 8
        %s485 = scalar_select %p484, %s14, 8
        %s486 = smul.addr %s485, 8
        %s487 = scalar_lea.vmem %s2, %s486
      $region44: #{our_model_forward.8} parent=39 // pred_fallthru
        _
    $region40: #{our_model_forward.8} parent=5 // pred_fallthru
      _
  $region6: #{our_model_forward.8} parent=0 // loop_footer
    %s12 = sadd.s32 1, %s8
  $region7: #{our_model_forward.8} parent=0 // loop_footer_branch
    %7 = sbr.rel target = $region3
  $region8: #{our_model_forward.8} parent=0 // loop_exit
    _

// kernel: our_model_forward.6
$region0: #{our_model_forward.6}
  #allocation0 [shape = 'u32[]', space=smem, size = 0x4, offset = 0x4, fixed_abs, tag = 'smem constant byte address 0x4 - core index']
  #allocation1 [shape = 'u32[72,128]{1,0:T(1,128)}', space=vmem, size = 0x9000, scoped, tag = 'internal scratch']
  %s0 = inlined_call_operand.vmem [shape: f32[8,8,256], index: 0, kind: input, shape index: {}]
  %s1 = inlined_call_operand.vmem [shape: bf16[8,2048], index: 1, kind: input, shape index: {}]
  %s2 = inlined_call_operand.vmem [shape: bf16[2048,128], index: 2, kind: input, shape index: {}]
  %s3 = inlined_call_operand.vmem [shape: f32[1,128], index: 3, kind: input, shape index: {}]
  %s4 = inlined_call_operand.vmem [shape: f32[8,128], index: 4, kind: output, shape index: {}]
  %s5 = sld [smem:[#allocation0]]
  $region26: #{our_model_forward.6} parent=0
    _
  %s7 = ssub.s32 1, %s5
  %s8 = scalar_select 0, %s7, %s5
  // Predicated region
  $region2: #{our_model_forward.6} parent=0 // pred_check
    _
  $region3: #{our_model_forward.6} parent=0 // pred_check_branch
    %10 = sbr.rel (0) target = $region5
  $region4: #{our_model_forward.6} parent=0 // pred_region
    _
  $region5: #{our_model_forward.6} parent=0 // pred_fallthru
    _
  // Predicated region
  $region6: #{our_model_forward.6} parent=0 // pred_check
    _
  $region7: #{our_model_forward.6} parent=0 // pred_check_branch
    %12 = sbr.rel (0) target = $region9
  $region8: #{our_model_forward.6} parent=0 // pred_region
    _
  $region9: #{our_model_forward.6} parent=0 // pred_fallthru
    _
  // Predicated region
  $region10: #{our_model_forward.6} parent=0 // pred_check
    _
  $region11: #{our_model_forward.6} parent=0 // pred_check_branch
    %14 = sbr.rel (0) target = $region13
  $region12: #{our_model_forward.6} parent=0 // pred_region
    _
  $region13: #{our_model_forward.6} parent=0 // pred_fallthru
    _
  // Predicated region
  $region14: #{our_model_forward.6} parent=0 // pred_check
    _
  $region15: #{our_model_forward.6} parent=0 // pred_check_branch
    %16 = sbr.rel (0) target = $region17
  $region16: #{our_model_forward.6} parent=0 // pred_region
    _
  $region17: #{our_model_forward.6} parent=0 // pred_fallthru
    _
  %v18 = vld [vmem:[%s0] sm:$0xff]
  %v19 = vld [vmem:[%s0 + $0x8] sm:$0xff]
  %v20 = vld [vmem:[%s0 + $0x10] sm:$0xff]
  %v21 = vld [vmem:[%s0 + $0x18] sm:$0xff]
  %v22 = vld [vmem:[%s0 + $0x20] sm:$0xff]
  %v23 = vld [vmem:[%s0 + $0x28] sm:$0xff]
  %v24 = vld [vmem:[%s0 + $0x30] sm:$0xff]
  %v25 = vld [vmem:[%s0 + $0x38] sm:$0xff]
  %v26 = vld [vmem:[%s0 + $0x40] sm:$0xff]
  %v27 = vld [vmem:[%s0 + $0x48] sm:$0xff]
  %v28 = vld [vmem:[%s0 + $0x50] sm:$0xff]
  %v29 = vld [vmem:[%s0 + $0x58] sm:$0xff]
  %v30 = vld [vmem:[%s0 + $0x60] sm:$0xff]
  %v31 = vld [vmem:[%s0 + $0x68] sm:$0xff]
  %v32 = vld [vmem:[%s0 + $0x70] sm:$0xff]
  %v33 = vld [vmem:[%s0 + $0x78] sm:$0xff]
  %v34 = vadd.f32 %v18, %v19
  %35 = vadd.xlane.f32.xlu0 %v34
  %v36 = vpop.xlane.xlu0 %35
  %v37 = vadd.f32 %v20, %v21
  %38 = vadd.xlane.f32.xlu0 %v37
  %v39 = vpop.xlane.xlu0 %38
  %v40 = vadd.f32 %v22, %v23
  %41 = vadd.xlane.f32.xlu0 %v40
  %v42 = vpop.xlane.xlu0 %41
  %v43 = vadd.f32 %v24, %v25
  %44 = vadd.xlane.f32.xlu0 %v43
  %v45 = vpop.xlane.xlu0 %44
  %v46 = vadd.f32 %v26, %v27
  %47 = vadd.xlane.f32.xlu0 %v46
  %v48 = vpop.xlane.xlu0 %47
  %v49 = vadd.f32 %v28, %v29
  %50 = vadd.xlane.f32.xlu0 %v49
  %v51 = vpop.xlane.xlu0 %50
  %v52 = vadd.f32 %v30, %v31
  %53 = vadd.xlane.f32.xlu0 %v52
  %v54 = vpop.xlane.xlu0 %53
  %v55 = vadd.f32 %v32, %v33
  %56 = vadd.xlane.f32.xlu0 %v55
  %v57 = vpop.xlane.xlu0 %56
  %v58 = vrcp.pop 256.0
  %v59 = vmul.f32 256.0, %v58
  %v60 = vsub.f32 1.0, %v59
  %v61 = vmul.f32 %v58, %v60
  %v62 = vadd.f32 %v58, %v61
  %vm63 = vweird.f32 %v58
  %v64 = vsel %vm63, %v58, %v62
  %v65 = vmul.f32 %v36, %v64
  %v66 = vmul.f32 %v39, %v64
  %v67 = vmul.f32 %v42, %v64
  %v68 = vmul.f32 %v45, %v64
  %v69 = vmul.f32 %v48, %v64
  %v70 = vmul.f32 %v51, %v64
  %v71 = vmul.f32 %v54, %v64
  %v72 = vmul.f32 %v57, %v64
  %v73 = vpack.c.bf16 %v65, %v65
  %v74 = vpack.c.bf16 %v66, %v66
  %v75 = vpack.c.bf16 %v67, %v67
  %v76 = vpack.c.bf16 %v68, %v68
  %v77 = vpack.c.bf16 %v69, %v69
  %v78 = vpack.c.bf16 %v70, %v70
  %v79 = vpack.c.bf16 %v71, %v71
  %v80 = vpack.c.bf16 %v72, %v72
  %v81 = vld [vmem:[%s1] sm:$0xff]
  %v82 = vld [vmem:[%s1 + $0x8] sm:$0xff]
  %v83 = vld [vmem:[%s1 + $0x10] sm:$0xff]
  %v84 = vld [vmem:[%s1 + $0x18] sm:$0xff]
  %v85 = vld [vmem:[%s1 + $0x20] sm:$0xff]
  %v86 = vld [vmem:[%s1 + $0x28] sm:$0xff]
  %v87 = vld [vmem:[%s1 + $0x30] sm:$0xff]
  %v88 = vld [vmem:[%s1 + $0x38] sm:$0xff]
  %v97 = vunpack.c.l.b16 %v73
  %v98 = vunpack.c.l.b16 %v74
  %v99 = vunpack.c.l.b16 %v75
  %v100 = vunpack.c.l.b16 %v76
  %v101 = vunpack.c.l.b16 %v77
  %v102 = vunpack.c.l.b16 %v78
  %v103 = vunpack.c.l.b16 %v79
  %v104 = vunpack.c.l.b16 %v80
  %v105 = vlaneseq
  %v106 = vand.u32 %v105, 127
  %v107 = vperm.slane %v97, %v106
  %v108 = vperm.slane %v98, %v106
  %v109 = vperm.slane %v99, %v106
  %v110 = vperm.slane %v100, %v106
  %v111 = vperm.slane %v101, %v106
  %v112 = vperm.slane %v102, %v106
  %v113 = vperm.slane %v103, %v106
  %v114 = vperm.slane %v104, %v106
  %vm115 = vcmask 1041409
  %v116 = vsel %vm115, %v108, %v107
  %vm117 = vcmask 1042434
  %v118 = vsel %vm117, %v109, %v116
  %vm119 = vcmask 1043459
  %v120 = vsel %vm119, %v110, %v118
  %vm121 = vcmask 1044484
  %v122 = vsel %vm121, %v111, %v120
  %vm123 = vcmask 1045509
  %v124 = vsel %vm123, %v112, %v122
  %vm125 = vcmask 1046534
  %v126 = vsel %vm125, %v113, %v124
  %vm127 = vcmask 1047559
  %v128 = vsel %vm127, %v114, %v126
  %v129 = vpack.c.b16 %v128, %v128
  %v138 = vunpack.c.l.b16 %v81
  %v139 = vunpack.c.h.b16 %v81
  %v140 = vunpack.c.l.b16 %v82
  %v141 = vunpack.c.h.b16 %v82
  %v142 = vunpack.c.l.b16 %v83
  %v143 = vunpack.c.h.b16 %v83
  %v144 = vunpack.c.l.b16 %v84
  %v145 = vunpack.c.h.b16 %v84
  %v146 = vunpack.c.l.b16 %v85
  %v147 = vunpack.c.h.b16 %v85
  %v148 = vunpack.c.l.b16 %v86
  %v149 = vunpack.c.h.b16 %v86
  %v150 = vunpack.c.l.b16 %v87
  %v151 = vunpack.c.h.b16 %v87
  %v152 = vunpack.c.l.b16 %v88
  %v153 = vunpack.c.h.b16 %v88
  %v154 = vpack.c.b16 %v138, %v138
  %v155 = vpack.c.b16 %v139, %v139
  %v156 = vpack.c.b16 %v140, %v140
  %v157 = vpack.c.b16 %v141, %v141
  %v158 = vpack.c.b16 %v142, %v142
  %v159 = vpack.c.b16 %v143, %v143
  %v160 = vpack.c.b16 %v144, %v144
  %v161 = vpack.c.b16 %v145, %v145
  %v162 = vpack.c.b16 %v146, %v146
  %v163 = vpack.c.b16 %v147, %v147
  %v164 = vpack.c.b16 %v148, %v148
  %v165 = vpack.c.b16 %v149, %v149
  %v166 = vpack.c.b16 %v150, %v150
  %v167 = vpack.c.b16 %v151, %v151
  %v168 = vpack.c.b16 %v152, %v152
  %v169 = vpack.c.b16 %v153, %v153
  %vm170 = vcmask 64512
  %v172 = vsel %vm170, %v129, 0
  %vm174 = vcmask 1043456
  %v176 = vsel %vm174, %v154, 0
  %v179 = vsel %vm174, %v155, 0
  %v182 = vsel %vm174, %v156, 0
  %v185 = vsel %vm174, %v157, 0
  %v188 = vsel %vm174, %v158, 0
  %v191 = vsel %vm174, %v159, 0
  %v194 = vsel %vm174, %v160, 0
  %v197 = vsel %vm174, %v161, 0
  %v200 = vsel %vm174, %v162, 0
  %v203 = vsel %vm174, %v163, 0
  %v206 = vsel %vm174, %v164, 0
  %v209 = vsel %vm174, %v165, 0
  %v212 = vsel %vm174, %v166, 0
  %v215 = vsel %vm174, %v167, 0
  %v218 = vsel %vm174, %v168, 0
  %v221 = vsel %vm174, %v169, 0
  %223 = vmatpush.bf16.msra.mxu0 0
  %224 = vmatpush.bf16.msra.mxu0 0
  %225 = vmatpush.bf16.msra.mxu0 0
  %226 = vmatpush.bf16.msra.mxu0 0
  %227 = vmatpush.bf16.msra.mxu0 0
  %228 = vmatpush.bf16.msra.mxu0 0
  %229 = vmatpush.bf16.msra.mxu0 0
  %230 = vmatpush.bf16.msra.mxu0 %v176
  %231 = vmatmul.bf16.gmra.mxu0 %v172
  %v232 = vpop.f32.mrf.mxu0
  %v233 = vadd.f32 0.0, %v232
  %v234 = vpop.f32.mrf.mxu0
  %235 = vdwg.mxu0
  %236 = vmatpush.bf16.msra.mxu0 0
  %237 = vmatpush.bf16.msra.mxu0 0
  %238 = vmatpush.bf16.msra.mxu0 0
  %239 = vmatpush.bf16.msra.mxu0 0
  %240 = vmatpush.bf16.msra.mxu0 0
  %241 = vmatpush.bf16.msra.mxu0 0
  %242 = vmatpush.bf16.msra.mxu0 0
  %243 = vmatpush.bf16.msra.mxu0 %v179
  %244 = vmatmul.bf16.gmra.mxu0 %v172
  %v245 = vpop.f32.mrf.mxu0
  %v246 = vadd.f32 0.0, %v245
  %v247 = vpop.f32.mrf.mxu0
  %248 = vdwg.mxu0
  %249 = vmatpush.bf16.msra.mxu0 0
  %250 = vmatpush.bf16.msra.mxu0 0
  %251 = vmatpush.bf16.msra.mxu0 0
  %252 = vmatpush.bf16.msra.mxu0 0
  %253 = vmatpush.bf16.msra.mxu0 0
  %254 = vmatpush.bf16.msra.mxu0 0
  %255 = vmatpush.bf16.msra.mxu0 0
  %256 = vmatpush.bf16.msra.mxu0 %v182
  %257 = vmatmul.bf16.gmra.mxu0 %v172
  %v258 = vpop.f32.mrf.mxu0
  %v259 = vadd.f32 0.0, %v258
  %v260 = vpop.f32.mrf.mxu0
  %261 = vdwg.mxu0
  %262 = vmatpush.bf16.msra.mxu0 0
  %263 = vmatpush.bf16.msra.mxu0 0
  %264 = vmatpush.bf16.msra.mxu0 0
  %265 = vmatpush.bf16.msra.mxu0 0
  %266 = vmatpush.bf16.msra.mxu0 0
  %267 = vmatpush.bf16.msra.mxu0 0
  %268 = vmatpush.bf16.msra.mxu0 0
  %269 = vmatpush.bf16.msra.mxu0 %v185
  %270 = vmatmul.bf16.gmra.mxu0 %v172
  %v271 = vpop.f32.mrf.mxu0
  %v272 = vadd.f32 0.0, %v271
  %v273 = vpop.f32.mrf.mxu0
  %274 = vdwg.mxu0
  %275 = vmatpush.bf16.msra.mxu0 0
  %276 = vmatpush.bf16.msra.mxu0 0
  %277 = vmatpush.bf16.msra.mxu0 0
  %278 = vmatpush.bf16.msra.mxu0 0
  %279 = vmatpush.bf16.msra.mxu0 0
  %280 = vmatpush.bf16.msra.mxu0 0
  %281 = vmatpush.bf16.msra.mxu0 0
  %282 = vmatpush.bf16.msra.mxu0 %v188
  %283 = vmatmul.bf16.gmra.mxu0 %v172
  %v284 = vpop.f32.mrf.mxu0
  %v285 = vadd.f32 0.0, %v284
  %v286 = vpop.f32.mrf.mxu0
  %287 = vdwg.mxu0
  %288 = vmatpush.bf16.msra.mxu0 0
  %289 = vmatpush.bf16.msra.mxu0 0
  %290 = vmatpush.bf16.msra.mxu0 0
  %291 = vmatpush.bf16.msra.mxu0 0
  %292 = vmatpush.bf16.msra.mxu0 0
  %293 = vmatpush.bf16.msra.mxu0 0
  %294 = vmatpush.bf16.msra.mxu0 0
  %295 = vmatpush.bf16.msra.mxu0 %v191
  %296 = vmatmul.bf16.gmra.mxu0 %v172
  %v297 = vpop.f32.mrf.mxu0
  %v298 = vadd.f32 0.0, %v297
  %v299 = vpop.f32.mrf.mxu0
  %300 = vdwg.mxu0
  %301 = vmatpush.bf16.msra.mxu0 0
  %302 = vmatpush.bf16.msra.mxu0 0
  %303 = vmatpush.bf16.msra.mxu0 0
  %304 = vmatpush.bf16.msra.mxu0 0
  %305 = vmatpush.bf16.msra.mxu0 0
  %306 = vmatpush.bf16.msra.mxu0 0
  %307 = vmatpush.bf16.msra.mxu0 0
  %308 = vmatpush.bf16.msra.mxu0 %v194
  %309 = vmatmul.bf16.gmra.mxu0 %v172
  %v310 = vpop.f32.mrf.mxu0
  %v311 = vadd.f32 0.0, %v310
  %v312 = vpop.f32.mrf.mxu0
  %313 = vdwg.mxu0
  %314 = vmatpush.bf16.msra.mxu0 0
  %315 = vmatpush.bf16.msra.mxu0 0
  %316 = vmatpush.bf16.msra.mxu0 0
  %317 = vmatpush.bf16.msra.mxu0 0
  %318 = vmatpush.bf16.msra.mxu0 0
  %319 = vmatpush.bf16.msra.mxu0 0
  %320 = vmatpush.bf16.msra.mxu0 0
  %321 = vmatpush.bf16.msra.mxu0 %v197
  %322 = vmatmul.bf16.gmra.mxu0 %v172
  %v323 = vpop.f32.mrf.mxu0
  %v324 = vadd.f32 0.0, %v323
  %v325 = vpop.f32.mrf.mxu0
  %326 = vdwg.mxu0
  %327 = vmatpush.bf16.msra.mxu0 0
  %328 = vmatpush.bf16.msra.mxu0 0
  %329 = vmatpush.bf16.msra.mxu0 0
  %330 = vmatpush.bf16.msra.mxu0 0
  %331 = vmatpush.bf16.msra.mxu0 0
  %332 = vmatpush.bf16.msra.mxu0 0
  %333 = vmatpush.bf16.msra.mxu0 0
  %334 = vmatpush.bf16.msra.mxu0 %v200
  %335 = vmatmul.bf16.gmra.mxu0 %v172
  %v336 = vpop.f32.mrf.mxu0
  %v337 = vadd.f32 0.0, %v336
  %v338 = vpop.f32.mrf.mxu0
  %339 = vdwg.mxu0
  %340 = vmatpush.bf16.msra.mxu0 0
  %341 = vmatpush.bf16.msra.mxu0 0
  %342 = vmatpush.bf16.msra.mxu0 0
  %343 = vmatpush.bf16.msra.mxu0 0
  %344 = vmatpush.bf16.msra.mxu0 0
  %345 = vmatpush.bf16.msra.mxu0 0
  %346 = vmatpush.bf16.msra.mxu0 0
  %347 = vmatpush.bf16.msra.mxu0 %v203
  %348 = vmatmul.bf16.gmra.mxu0 %v172
  %v349 = vpop.f32.mrf.mxu0
  %v350 = vadd.f32 0.0, %v349
  %v351 = vpop.f32.mrf.mxu0
  %352 = vdwg.mxu0
  %353 = vmatpush.bf16.msra.mxu0 0
  %354 = vmatpush.bf16.msra.mxu0 0
  %355 = vmatpush.bf16.msra.mxu0 0
  %356 = vmatpush.bf16.msra.mxu0 0
  %357 = vmatpush.bf16.msra.mxu0 0
  %358 = vmatpush.bf16.msra.mxu0 0
  %359 = vmatpush.bf16.msra.mxu0 0
  %360 = vmatpush.bf16.msra.mxu0 %v206
  %361 = vmatmul.bf16.gmra.mxu0 %v172
  %v362 = vpop.f32.mrf.mxu0
  %v363 = vadd.f32 0.0, %v362
  %v364 = vpop.f32.mrf.mxu0
  %365 = vdwg.mxu0
  %366 = vmatpush.bf16.msra.mxu0 0
  %367 = vmatpush.bf16.msra.mxu0 0
  %368 = vmatpush.bf16.msra.mxu0 0
  %369 = vmatpush.bf16.msra.mxu0 0
  %370 = vmatpush.bf16.msra.mxu0 0
  %371 = vmatpush.bf16.msra.mxu0 0
  %372 = vmatpush.bf16.msra.mxu0 0
  %373 = vmatpush.bf16.msra.mxu0 %v209
  %374 = vmatmul.bf16.gmra.mxu0 %v172
  %v375 = vpop.f32.mrf.mxu0
  %v376 = vadd.f32 0.0, %v375
  %v377 = vpop.f32.mrf.mxu0
  %378 = vdwg.mxu0
  %379 = vmatpush.bf16.msra.mxu0 0
  %380 = vmatpush.bf16.msra.mxu0 0
  %381 = vmatpush.bf16.msra.mxu0 0
  %382 = vmatpush.bf16.msra.mxu0 0
  %383 = vmatpush.bf16.msra.mxu0 0
  %384 = vmatpush.bf16.msra.mxu0 0
  %385 = vmatpush.bf16.msra.mxu0 0
  %386 = vmatpush.bf16.msra.mxu0 %v212
  %387 = vmatmul.bf16.gmra.mxu0 %v172
  %v388 = vpop.f32.mrf.mxu0
  %v389 = vadd.f32 0.0, %v388
  %v390 = vpop.f32.mrf.mxu0
  %391 = vdwg.mxu0
  %392 = vmatpush.bf16.msra.mxu0 0
  %393 = vmatpush.bf16.msra.mxu0 0
  %394 = vmatpush.bf16.msra.mxu0 0
  %395 = vmatpush.bf16.msra.mxu0 0
  %396 = vmatpush.bf16.msra.mxu0 0
  %397 = vmatpush.bf16.msra.mxu0 0
  %398 = vmatpush.bf16.msra.mxu0 0
  %399 = vmatpush.bf16.msra.mxu0 %v215
  %400 = vmatmul.bf16.gmra.mxu0 %v172
  %v401 = vpop.f32.mrf.mxu0
  %v402 = vadd.f32 0.0, %v401
  %v403 = vpop.f32.mrf.mxu0
  %404 = vdwg.mxu0
  %405 = vmatpush.bf16.msra.mxu0 0
  %406 = vmatpush.bf16.msra.mxu0 0
  %407 = vmatpush.bf16.msra.mxu0 0
  %408 = vmatpush.bf16.msra.mxu0 0
  %409 = vmatpush.bf16.msra.mxu0 0
  %410 = vmatpush.bf16.msra.mxu0 0
  %411 = vmatpush.bf16.msra.mxu0 0
  %412 = vmatpush.bf16.msra.mxu0 %v218
  %413 = vmatmul.bf16.gmra.mxu0 %v172
  %v414 = vpop.f32.mrf.mxu0
  %v415 = vadd.f32 0.0, %v414
  %v416 = vpop.f32.mrf.mxu0
  %417 = vdwg.mxu0
  %418 = vmatpush.bf16.msra.mxu0 0
  %419 = vmatpush.bf16.msra.mxu0 0
  %420 = vmatpush.bf16.msra.mxu0 0
  %421 = vmatpush.bf16.msra.mxu0 0
  %422 = vmatpush.bf16.msra.mxu0 0
  %423 = vmatpush.bf16.msra.mxu0 0
  %424 = vmatpush.bf16.msra.mxu0 0
  %425 = vmatpush.bf16.msra.mxu0 %v221
  %426 = vmatmul.bf16.gmra.mxu0 %v172
  %v427 = vpop.f32.mrf.mxu0
  %v428 = vadd.f32 0.0, %v427
  %v429 = vpop.f32.mrf.mxu0
  %430 = vdwg.mxu0
  %v431 = vmax.f32 %v233, 0.0
  %v432 = vmax.f32 %v246, 0.0
  %v433 = vmax.f32 %v259, 0.0
  %v434 = vmax.f32 %v272, 0.0
  %v435 = vmax.f32 %v285, 0.0
  %v436 = vmax.f32 %v298, 0.0
  %v437 = vmax.f32 %v311, 0.0
  %v438 = vmax.f32 %v324, 0.0
  %v439 = vmax.f32 %v337, 0.0
  %v440 = vmax.f32 %v350, 0.0
  %v441 = vmax.f32 %v363, 0.0
  %v442 = vmax.f32 %v376, 0.0
  %v443 = vmax.f32 %v389, 0.0
  %v444 = vmax.f32 %v402, 0.0
  %v445 = vmax.f32 %v415, 0.0
  %v446 = vmax.f32 %v428, 0.0
  %v447 = vpack.c.bf16 %v431, %v431
  %v448 = vpack.c.bf16 %v432, %v432
  %v449 = vpack.c.bf16 %v433, %v433
  %v450 = vpack.c.bf16 %v434, %v434
  %v451 = vpack.c.bf16 %v435, %v435
  %v452 = vpack.c.bf16 %v436, %v436
  %v453 = vpack.c.bf16 %v437, %v437
  %v454 = vpack.c.bf16 %v438, %v438
  %v455 = vpack.c.bf16 %v439, %v439
  %v456 = vpack.c.bf16 %v440, %v440
  %v457 = vpack.c.bf16 %v441, %v441
  %v458 = vpack.c.bf16 %v442, %v442
  %v459 = vpack.c.bf16 %v443, %v443
  %v460 = vpack.c.bf16 %v444, %v444
  %v461 = vpack.c.bf16 %v445, %v445
  %v462 = vpack.c.bf16 %v446, %v446
  %v463 = vld [vmem:[%s2] sm:$0xf]
  %v464 = vld [vmem:[%s2 + $0x4] sm:$0xf]
  %v465 = vld [vmem:[%s2 + $0x8] sm:$0xf]
  %v466 = vld [vmem:[%s2 + $0xc] sm:$0xf]
  %v467 = vld [vmem:[%s2 + $0x10] sm:$0xf]
  %v468 = vld [vmem:[%s2 + $0x14] sm:$0xf]
  %v469 = vld [vmem:[%s2 + $0x18] sm:$0xf]
  %v470 = vld [vmem:[%s2 + $0x1c] sm:$0xf]
  %v471 = vld [vmem:[%s2 + $0x20] sm:$0xf]
  %v472 = vld [vmem:[%s2 + $0x24] sm:$0xf]
  %v473 = vld [vmem:[%s2 + $0x28] sm:$0xf]
  %v474 = vld [vmem:[%s2 + $0x2c] sm:$0xf]
  %v475 = vld [vmem:[%s2 + $0x30] sm:$0xf]
  %v476 = vld [vmem:[%s2 + $0x34] sm:$0xf]
  %v477 = vld [vmem:[%s2 + $0x38] sm:$0xf]
  %v478 = vld [vmem:[%s2 + $0x3c] sm:$0xf]
  %v479 = vld [vmem:[%s2 + $0x40] sm:$0xf]
  %v480 = vld [vmem:[%s2 + $0x44] sm:$0xf]
  %v481 = vld [vmem:[%s2 + $0x48] sm:$0xf]
  %v482 = vld [vmem:[%s2 + $0x4c] sm:$0xf]
  %v483 = vld [vmem:[%s2 + $0x50] sm:$0xf]
  %v484 = vld [vmem:[%s2 + $0x54] sm:$0xf]
  %v485 = vld [vmem:[%s2 + $0x58] sm:$0xf]
  %v486 = vld [vmem:[%s2 + $0x5c] sm:$0xf]
  %v487 = vld [vmem:[%s2 + $0x60] sm:$0xf]
  %v488 = vld [vmem:[%s2 + $0x64] sm:$0xf]
  %v489 = vld [vmem:[%s2 + $0x68] sm:$0xf]
  %v490 = vld [vmem:[%s2 + $0x6c] sm:$0xf]
  %v491 = vld [vmem:[%s2 + $0x70] sm:$0xf]
  %v492 = vld [vmem:[%s2 + $0x74] sm:$0xf]
  %v493 = vld [vmem:[%s2 + $0x78] sm:$0xf]
  %v494 = vld [vmem:[%s2 + $0x7c] sm:$0xf]
  %v495 = vld [vmem:[%s2 + $0x80] sm:$0xf]
  %v496 = vld [vmem:[%s2 + $0x84] sm:$0xf]
  %v497 = vld [vmem:[%s2 + $0x88] sm:$0xf]
  %v498 = vld [vmem:[%s2 + $0x8c] sm:$0xf]
  %v499 = vld [vmem:[%s2 + $0x90] sm:$0xf]
  %v500 = vld [vmem:[%s2 + $0x94] sm:$0xf]
  %v501 = vld [vmem:[%s2 + $0x98] sm:$0xf]
  %v502 = vld [vmem:[%s2 + $0x9c] sm:$0xf]
  %v503 = vld [vmem:[%s2 + $0xa0] sm:$0xf]
  %v504 = vld [vmem:[%s2 + $0xa4] sm:$0xf]
  %v505 = vld [vmem:[%s2 + $0xa8] sm:$0xf]
  %v506 = vld [vmem:[%s2 + $0xac] sm:$0xf]
  %v507 = vld [vmem:[%s2 + $0xb0] sm:$0xf]
  %v508 = vld [vmem:[%s2 + $0xb4] sm:$0xf]
  %v509 = vld [vmem:[%s2 + $0xb8] sm:$0xf]
  %v510 = vld [vmem:[%s2 + $0xbc] sm:$0xf]
  %v511 = vld [vmem:[%s2 + $0xc0] sm:$0xf]
  %v512 = vld [vmem:[%s2 + $0xc4] sm:$0xf]
  %v513 = vld [vmem:[%s2 + $0xc8] sm:$0xf]
  %v514 = vld [vmem:[%s2 + $0xcc] sm:$0xf]
  %v515 = vld [vmem:[%s2 + $0xd0] sm:$0xf]
  %v516 = vld [vmem:[%s2 + $0xd4] sm:$0xf]
  %v517 = vld [vmem:[%s2 + $0xd8] sm:$0xf]
  %v518 = vld [vmem:[%s2 + $0xdc] sm:$0xf]
  %v519 = vld [vmem:[%s2 + $0xe0] sm:$0xf]
  %v520 = vld [vmem:[%s2 + $0xe4] sm:$0xf]
  %v521 = vld [vmem:[%s2 + $0xe8] sm:$0xf]
  %v522 = vld [vmem:[%s2 + $0xec] sm:$0xf]
  %v523 = vld [vmem:[%s2 + $0xf0] sm:$0xf]
  %v524 = vld [vmem:[%s2 + $0xf4] sm:$0xf]
  %v525 = vld [vmem:[%s2 + $0xf8] sm:$0xf]
  %v526 = vld [vmem:[%s2 + $0xfc] sm:$0xf]
  %v527 = vld [vmem:[%s2 + $0x100] sm:$0xf]
  %v528 = vld [vmem:[%s2 + $0x104] sm:$0xf]
  %v529 = vld [vmem:[%s2 + $0x108] sm:$0xf]
  %v530 = vld [vmem:[%s2 + $0x10c] sm:$0xf]
  %v531 = vld [vmem:[%s2 + $0x110] sm:$0xf]
  %v532 = vld [vmem:[%s2 + $0x114] sm:$0xf]
  %v533 = vld [vmem:[%s2 + $0x118] sm:$0xf]
  %v534 = vld [vmem:[%s2 + $0x11c] sm:$0xf]
  %v535 = vld [vmem:[%s2 + $0x120] sm:$0xf]
  %v536 = vld [vmem:[%s2 + $0x124] sm:$0xf]
  %v537 = vld [vmem:[%s2 + $0x128] sm:$0xf]
  %v538 = vld [vmem:[%s2 + $0x12c] sm:$0xf]
  %v539 = vld [vmem:[%s2 + $0x130] sm:$0xf]
  %v540 = vld [vmem:[%s2 + $0x134] sm:$0xf]
  %v541 = vld [vmem:[%s2 + $0x138] sm:$0xf]
  %v542 = vld [vmem:[%s2 + $0x13c] sm:$0xf]
  %v543 = vld [vmem:[%s2 + $0x140] sm:$0xf]
  %v544 = vld [vmem:[%s2 + $0x144] sm:$0xf]
  %v545 = vld [vmem:[%s2 + $0x148] sm:$0xf]
  %v546 = vld [vmem:[%s2 + $0x14c] sm:$0xf]
  %v547 = vld [vmem:[%s2 + $0x150] sm:$0xf]
  %v548 = vld [vmem:[%s2 + $0x154] sm:$0xf]
  %v549 = vld [vmem:[%s2 + $0x158] sm:$0xf]
  %v550 = vld [vmem:[%s2 + $0x15c] sm:$0xf]
  %v551 = vld [vmem:[%s2 + $0x160] sm:$0xf]
  %v552 = vld [vmem:[%s2 + $0x164] sm:$0xf]
  %v553 = vld [vmem:[%s2 + $0x168] sm:$0xf]
  %v554 = vld [vmem:[%s2 + $0x16c] sm:$0xf]
  %v555 = vld [vmem:[%s2 + $0x170] sm:$0xf]
  %v556 = vld [vmem:[%s2 + $0x174] sm:$0xf]
  %v557 = vld [vmem:[%s2 + $0x178] sm:$0xf]
  %v558 = vld [vmem:[%s2 + $0x17c] sm:$0xf]
  %v559 = vld [vmem:[%s2 + $0x180] sm:$0xf]
  %v560 = vld [vmem:[%s2 + $0x184] sm:$0xf]
  %v561 = vld [vmem:[%s2 + $0x188] sm:$0xf]
  %v562 = vld [vmem:[%s2 + $0x18c] sm:$0xf]
  %v563 = vld [vmem:[%s2 + $0x190] sm:$0xf]
  %v564 = vld [vmem:[%s2 + $0x194] sm:$0xf]
  %v565 = vld [vmem:[%s2 + $0x198] sm:$0xf]
  %v566 = vld [vmem:[%s2 + $0x19c] sm:$0xf]
  %v567 = vld [vmem:[%s2 + $0x1a0] sm:$0xf]
  %v568 = vld [vmem:[%s2 + $0x1a4] sm:$0xf]
  %v569 = vld [vmem:[%s2 + $0x1a8] sm:$0xf]
  %v570 = vld [vmem:[%s2 + $0x1ac] sm:$0xf]
  %v571 = vld [vmem:[%s2 + $0x1b0] sm:$0xf]
  %v572 = vld [vmem:[%s2 + $0x1b4] sm:$0xf]
  %v573 = vld [vmem:[%s2 + $0x1b8] sm:$0xf]
  %v574 = vld [vmem:[%s2 + $0x1bc] sm:$0xf]
  %v575 = vld [vmem:[%s2 + $0x1c0] sm:$0xf]
  %v576 = vld [vmem:[%s2 + $0x1c4] sm:$0xf]
  %v577 = vld [vmem:[%s2 + $0x1c8] sm:$0xf]
  %v578 = vld [vmem:[%s2 + $0x1cc] sm:$0xf]
  %v579 = vld [vmem:[%s2 + $0x1d0] sm:$0xf]
  %v580 = vld [vmem:[%s2 + $0x1d4] sm:$0xf]
  %v581 = vld [vmem:[%s2 + $0x1d8] sm:$0xf]
  %v582 = vld [vmem:[%s2 + $0x1dc] sm:$0xf]
  %v583 = vld [vmem:[%s2 + $0x1e0] sm:$0xf]
  %v584 = vld [vmem:[%s2 + $0x1e4] sm:$0xf]
  %v585 = vld [vmem:[%s2 + $0x1e8] sm:$0xf]
  %v586 = vld [vmem:[%s2 + $0x1ec] sm:$0xf]
  %v587 = vld [vmem:[%s2 + $0x1f0] sm:$0xf]
  %v588 = vld [vmem:[%s2 + $0x1f4] sm:$0xf]
  %v589 = vld [vmem:[%s2 + $0x1f8] sm:$0xf]
  %v590 = vld [vmem:[%s2 + $0x1fc] sm:$0xf]
  %v591 = vld [vmem:[%s2 + $0x200] sm:$0xf]
  %v592 = vld [vmem:[%s2 + $0x204] sm:$0xf]
  %v593 = vld [vmem:[%s2 + $0x208] sm:$0xf]
  %v594 = vld [vmem:[%s2 + $0x20c] sm:$0xf]
  %v595 = vld [vmem:[%s2 + $0x210] sm:$0xf]
  %v596 = vld [vmem:[%s2 + $0x214] sm:$0xf]
  %v597 = vld [vmem:[%s2 + $0x218] sm:$0xf]
  %v598 = vld [vmem:[%s2 + $0x21c] sm:$0xf]
  %v599 = vld [vmem:[%s2 + $0x220] sm:$0xf]
  %v600 = vld [vmem:[%s2 + $0x224] sm:$0xf]
  %v601 = vld [vmem:[%s2 + $0x228] sm:$0xf]
  %v602 = vld [vmem:[%s2 + $0x22c] sm:$0xf]
  %v603 = vld [vmem:[%s2 + $0x230] sm:$0xf]
  %v604 = vld [vmem:[%s2 + $0x234] sm:$0xf]
  %v605 = vld [vmem:[%s2 + $0x238] sm:$0xf]
  %v606 = vld [vmem:[%s2 + $0x23c] sm:$0xf]
  %v607 = vld [vmem:[%s2 + $0x240] sm:$0xf]
  %v608 = vld [vmem:[%s2 + $0x244] sm:$0xf]
  %v609 = vld [vmem:[%s2 + $0x248] sm:$0xf]
  %v610 = vld [vmem:[%s2 + $0x24c] sm:$0xf]
  %v611 = vld [vmem:[%s2 + $0x250] sm:$0xf]
  %v612 = vld [vmem:[%s2 + $0x254] sm:$0xf]
  %v613 = vld [vmem:[%s2 + $0x258] sm:$0xf]
  %v614 = vld [vmem:[%s2 + $0x25c] sm:$0xf]
  %v615 = vld [vmem:[%s2 + $0x260] sm:$0xf]
  %v616 = vld [vmem:[%s2 + $0x264] sm:$0xf]
  %v617 = vld [vmem:[%s2 + $0x268] sm:$0xf]
  %v618 = vld [vmem:[%s2 + $0x26c] sm:$0xf]
  %v619 = vld [vmem:[%s2 + $0x270] sm:$0xf]
  %v620 = vld [vmem:[%s2 + $0x274] sm:$0xf]
  %v621 = vld [vmem:[%s2 + $0x278] sm:$0xf]
  %v622 = vld [vmem:[%s2 + $0x27c] sm:$0xf]
  %v623 = vld [vmem:[%s2 + $0x280] sm:$0xf]
  %v624 = vld [vmem:[%s2 + $0x284] sm:$0xf]
  %v625 = vld [vmem:[%s2 + $0x288] sm:$0xf]
  %v626 = vld [vmem:[%s2 + $0x28c] sm:$0xf]
  %v627 = vld [vmem:[%s2 + $0x290] sm:$0xf]
  %v628 = vld [vmem:[%s2 + $0x294] sm:$0xf]
  %v629 = vld [vmem:[%s2 + $0x298] sm:$0xf]
  %v630 = vld [vmem:[%s2 + $0x29c] sm:$0xf]
  %v631 = vld [vmem:[%s2 + $0x2a0] sm:$0xf]
  %v632 = vld [vmem:[%s2 + $0x2a4] sm:$0xf]
  %v633 = vld [vmem:[%s2 + $0x2a8] sm:$0xf]
  %v634 = vld [vmem:[%s2 + $0x2ac] sm:$0xf]
  %v635 = vld [vmem:[%s2 + $0x2b0] sm:$0xf]
  %v636 = vld [vmem:[%s2 + $0x2b4] sm:$0xf]
  %v637 = vld [vmem:[%s2 + $0x2b8] sm:$0xf]
  %v638 = vld [vmem:[%s2 + $0x2bc] sm:$0xf]
  %v639 = vld [vmem:[%s2 + $0x2c0] sm:$0xf]
  %v640 = vld [vmem:[%s2 + $0x2c4] sm:$0xf]
  %v641 = vld [vmem:[%s2 + $0x2c8] sm:$0xf]
  %v642 = vld [vmem:[%s2 + $0x2cc] sm:$0xf]
  %v643 = vld [vmem:[%s2 + $0x2d0] sm:$0xf]
  %v644 = vld [vmem:[%s2 + $0x2d4] sm:$0xf]
  %v645 = vld [vmem:[%s2 + $0x2d8] sm:$0xf]
  %v646 = vld [vmem:[%s2 + $0x2dc] sm:$0xf]
  %v647 = vld [vmem:[%s2 + $0x2e0] sm:$0xf]
  %v648 = vld [vmem:[%s2 + $0x2e4] sm:$0xf]
  %v649 = vld [vmem:[%s2 + $0x2e8] sm:$0xf]
  %v650 = vld [vmem:[%s2 + $0x2ec] sm:$0xf]
  %v651 = vld [vmem:[%s2 + $0x2f0] sm:$0xf]
  %v652 = vld [vmem:[%s2 + $0x2f4] sm:$0xf]
  %v653 = vld [vmem:[%s2 + $0x2f8] sm:$0xf]
  %v654 = vld [vmem:[%s2 + $0x2fc] sm:$0xf]
  %v655 = vld [vmem:[%s2 + $0x300] sm:$0xf]
  %v656 = vld [vmem:[%s2 + $0x304] sm:$0xf]
  %v657 = vld [vmem:[%s2 + $0x308] sm:$0xf]
  %v658 = vld [vmem:[%s2 + $0x30c] sm:$0xf]
  %v659 = vld [vmem:[%s2 + $0x310] sm:$0xf]
  %v660 = vld [vmem:[%s2 + $0x314] sm:$0xf]
  %v661 = vld [vmem:[%s2 + $0x318] sm:$0xf]
  %v662 = vld [vmem:[%s2 + $0x31c] sm:$0xf]
  %v663 = vld [vmem:[%s2 + $0x320] sm:$0xf]
  %v664 = vld [vmem:[%s2 + $0x324] sm:$0xf]
  %v665 = vld [vmem:[%s2 + $0x328] sm:$0xf]
  %v666 = vld [vmem:[%s2 + $0x32c] sm:$0xf]
  %v667 = vld [vmem:[%s2 + $0x330] sm:$0xf]
  %v668 = vld [vmem:[%s2 + $0x334] sm:$0xf]
  %v669 = vld [vmem:[%s2 + $0x338] sm:$0xf]
  %v670 = vld [vmem:[%s2 + $0x33c] sm:$0xf]
  %v671 = vld [vmem:[%s2 + $0x340] sm:$0xf]
  %v672 = vld [vmem:[%s2 + $0x344] sm:$0xf]
  %v673 = vld [vmem:[%s2 + $0x348] sm:$0xf]
  %v674 = vld [vmem:[%s2 + $0x34c] sm:$0xf]
  %v675 = vld [vmem:[%s2 + $0x350] sm:$0xf]
  %v676 = vld [vmem:[%s2 + $0x354] sm:$0xf]
  %v677 = vld [vmem:[%s2 + $0x358] sm:$0xf]
  %v678 = vld [vmem:[%s2 + $0x35c] sm:$0xf]
  %v679 = vld [vmem:[%s2 + $0x360] sm:$0xf]
  %v680 = vld [vmem:[%s2 + $0x364] sm:$0xf]
  %v681 = vld [vmem:[%s2 + $0x368] sm:$0xf]
  %v682 = vld [vmem:[%s2 + $0x36c] sm:$0xf]
  %v683 = vld [vmem:[%s2 + $0x370] sm:$0xf]
  %v684 = vld [vmem:[%s2 + $0x374] sm:$0xf]
  %v685 = vld [vmem:[%s2 + $0x378] sm:$0xf]
  %v686 = vld [vmem:[%s2 + $0x37c] sm:$0xf]
  %v687 = vld [vmem:[%s2 + $0x380] sm:$0xf]
  %v688 = vld [vmem:[%s2 + $0x384] sm:$0xf]
  %v689 = vld [vmem:[%s2 + $0x388] sm:$0xf]
  %v690 = vld [vmem:[%s2 + $0x38c] sm:$0xf]
  %v691 = vld [vmem:[%s2 + $0x390] sm:$0xf]
  %v692 = vld [vmem:[%s2 + $0x394] sm:$0xf]
  %v693 = vld [vmem:[%s2 + $0x398] sm:$0xf]
  %v694 = vld [vmem:[%s2 + $0x39c] sm:$0xf]
  %v695 = vld [vmem:[%s2 + $0x3a0] sm:$0xf]
  %v696 = vld [vmem:[%s2 + $0x3a4] sm:$0xf]
  %v697 = vld [vmem:[%s2 + $0x3a8] sm:$0xf]
  %v698 = vld [vmem:[%s2 + $0x3ac] sm:$0xf]
  %v699 = vld [vmem:[%s2 + $0x3b0] sm:$0xf]
  %v700 = vld [vmem:[%s2 + $0x3b4] sm:$0xf]
  %v701 = vld [vmem:[%s2 + $0x3b8] sm:$0xf]
  %v702 = vld [vmem:[%s2 + $0x3bc] sm:$0xf]
  %v703 = vld [vmem:[%s2 + $0x3c0] sm:$0xf]
  %v704 = vld [vmem:[%s2 + $0x3c4] sm:$0xf]
  %v705 = vld [vmem:[%s2 + $0x3c8] sm:$0xf]
  %v706 = vld [vmem:[%s2 + $0x3cc] sm:$0xf]
  %v707 = vld [vmem:[%s2 + $0x3d0] sm:$0xf]
  %v708 = vld [vmem:[%s2 + $0x3d4] sm:$0xf]
  %v709 = vld [vmem:[%s2 + $0x3d8] sm:$0xf]
  %v710 = vld [vmem:[%s2 + $0x3dc] sm:$0xf]
  %v711 = vld [vmem:[%s2 + $0x3e0] sm:$0xf]
  %v712 = vld [vmem:[%s2 + $0x3e4] sm:$0xf]
  %v713 = vld [vmem:[%s2 + $0x3e8] sm:$0xf]
  %v714 = vld [vmem:[%s2 + $0x3ec] sm:$0xf]
  %v715 = vld [vmem:[%s2 + $0x3f0] sm:$0xf]
  %v716 = vld [vmem:[%s2 + $0x3f4] sm:$0xf]
  %v717 = vld [vmem:[%s2 + $0x3f8] sm:$0xf]
  %v718 = vld [vmem:[%s2 + $0x3fc] sm:$0xf]
  %v719 = vld [vmem:[%s3] sm:$0x1]
  %v721 = vperm.slane %v719, 0
  %v979 = vunpack.c.l.b16 %v463
  %v980 = vunpack.c.l.b16 %v464
  %v981 = vunpack.c.l.b16 %v465
  %v982 = vunpack.c.l.b16 %v466
  %v983 = vunpack.c.l.b16 %v467
  %v984 = vunpack.c.l.b16 %v468
  %v985 = vunpack.c.l.b16 %v469
  %v986 = vunpack.c.l.b16 %v470
  %v987 = vunpack.c.l.b16 %v471
  %v988 = vunpack.c.l.b16 %v472
  %v989 = vunpack.c.l.b16 %v473
  %v990 = vunpack.c.l.b16 %v474
  %v991 = vunpack.c.l.b16 %v475
  %v992 = vunpack.c.l.b16 %v476
  %v993 = vunpack.c.l.b16 %v477
  %v994 = vunpack.c.l.b16 %v478
  %v995 = vunpack.c.l.b16 %v479
  %v996 = vunpack.c.l.b16 %v480
  %v997 = vunpack.c.l.b16 %v481
  %v998 = vunpack.c.l.b16 %v482
  %v999 = vunpack.c.l.b16 %v483
  %v1000 = vunpack.c.l.b16 %v484
  %v1001 = vunpack.c.l.b16 %v485
  %v1002 = vunpack.c.l.b16 %v486
  %v1003 = vunpack.c.l.b16 %v487
  %v1004 = vunpack.c.l.b16 %v488
  %v1005 = vunpack.c.l.b16 %v489
  %v1006 = vunpack.c.l.b16 %v490
  %v1007 = vunpack.c.l.b16 %v491
  %v1008 = vunpack.c.l.b16 %v492
  %v1009 = vunpack.c.l.b16 %v493
  %v1010 = vunpack.c.l.b16 %v494
  %v1011 = vunpack.c.l.b16 %v495
  %v1012 = vunpack.c.l.b16 %v496
  %v1013 = vunpack.c.l.b16 %v497
  %v1014 = vunpack.c.l.b16 %v498
  %v1015 = vunpack.c.l.b16 %v499
  %v1016 = vunpack.c.l.b16 %v500
  %v1017 = vunpack.c.l.b16 %v501
  %v1018 = vunpack.c.l.b16 %v502
  %v1019 = vunpack.c.l.b16 %v503
  %v1020 = vunpack.c.l.b16 %v504
  %v1021 = vunpack.c.l.b16 %v505
  %v1022 = vunpack.c.l.b16 %v506
  %v1023 = vunpack.c.l.b16 %v507
  %v1024 = vunpack.c.l.b16 %v508
  %v1025 = vunpack.c.l.b16 %v509
  %v1026 = vunpack.c.l.b16 %v510
  %v1027 = vunpack.c.l.b16 %v511
  %v1028 = vunpack.c.l.b16 %v512
  %v1029 = vunpack.c.l.b16 %v513
  %v1030 = vunpack.c.l.b16 %v514
  %v1031 = vunpack.c.l.b16 %v515
  %v1032 = vunpack.c.l.b16 %v516
  %v1033 = vunpack.c.l.b16 %v517
  %v1034 = vunpack.c.l.b16 %v518
  %v1035 = vunpack.c.l.b16 %v519
  %v1036 = vunpack.c.l.b16 %v520
  %v1037 = vunpack.c.l.b16 %v521
  %v1038 = vunpack.c.l.b16 %v522
  %v1039 = vunpack.c.l.b16 %v523
  %v1040 = vunpack.c.l.b16 %v524
  %v1041 = vunpack.c.l.b16 %v525
  %v1042 = vunpack.c.l.b16 %v526
  %v1043 = vunpack.c.l.b16 %v527
  %v1044 = vunpack.c.l.b16 %v528
  %v1045 = vunpack.c.l.b16 %v529
  %v1046 = vunpack.c.l.b16 %v530
  %v1047 = vunpack.c.l.b16 %v531
  %v1048 = vunpack.c.l.b16 %v532
  %v1049 = vunpack.c.l.b16 %v533
  %v1050 = vunpack.c.l.b16 %v534
  %v1051 = vunpack.c.l.b16 %v535
  %v1052 = vunpack.c.l.b16 %v536
  %v1053 = vunpack.c.l.b16 %v537
  %v1054 = vunpack.c.l.b16 %v538
  %v1055 = vunpack.c.l.b16 %v539
  %v1056 = vunpack.c.l.b16 %v540
  %v1057 = vunpack.c.l.b16 %v541
  %v1058 = vunpack.c.l.b16 %v542
  %v1059 = vunpack.c.l.b16 %v543
  %v1060 = vunpack.c.l.b16 %v544
  %v1061 = vunpack.c.l.b16 %v545
  %v1062 = vunpack.c.l.b16 %v546
  %v1063 = vunpack.c.l.b16 %v547
  %v1064 = vunpack.c.l.b16 %v548
  %v1065 = vunpack.c.l.b16 %v549
  %v1066 = vunpack.c.l.b16 %v550
  %v1067 = vunpack.c.l.b16 %v551
  %v1068 = vunpack.c.l.b16 %v552
  %v1069 = vunpack.c.l.b16 %v553
  %v1070 = vunpack.c.l.b16 %v554
  %v1071 = vunpack.c.l.b16 %v555
  %v1072 = vunpack.c.l.b16 %v556
  %v1073 = vunpack.c.l.b16 %v557
  %v1074 = vunpack.c.l.b16 %v558
  %v1075 = vunpack.c.l.b16 %v559
  %v1076 = vunpack.c.l.b16 %v560
  %v1077 = vunpack.c.l.b16 %v561
  %v1078 = vunpack.c.l.b16 %v562
  %v1079 = vunpack.c.l.b16 %v563
  %v1080 = vunpack.c.l.b16 %v564
  %v1081 = vunpack.c.l.b16 %v565
  %v1082 = vunpack.c.l.b16 %v566
  %v1083 = vunpack.c.l.b16 %v567
  %v1084 = vunpack.c.l.b16 %v568
  %v1085 = vunpack.c.l.b16 %v569
  %v1086 = vunpack.c.l.b16 %v570
  %v1087 = vunpack.c.l.b16 %v571
  %v1088 = vunpack.c.l.b16 %v572
  %v1089 = vunpack.c.l.b16 %v573
  %v1090 = vunpack.c.l.b16 %v574
  %v1091 = vunpack.c.l.b16 %v575
  %v1092 = vunpack.c.l.b16 %v576
  %v1093 = vunpack.c.l.b16 %v577
  %v1094 = vunpack.c.l.b16 %v578
  %v1095 = vunpack.c.l.b16 %v579
  %v1096 = vunpack.c.l.b16 %v580
  %v1097 = vunpack.c.l.b16 %v581
  %v1098 = vunpack.c.l.b16 %v582
  %v1099 = vunpack.c.l.b16 %v583
  %v1100 = vunpack.c.l.b16 %v584
  %v1101 = vunpack.c.l.b16 %v585
  %v1102 = vunpack.c.l.b16 %v586
  %v1103 = vunpack.c.l.b16 %v587
  %v1104 = vunpack.c.l.b16 %v588
  %v1105 = vunpack.c.l.b16 %v589
  %v1106 = vunpack.c.l.b16 %v590
  %v1107 = vunpack.c.l.b16 %v591
  %v1108 = vunpack.c.l.b16 %v592
  %v1109 = vunpack.c.l.b16 %v593
  %v1110 = vunpack.c.l.b16 %v594
  %v1111 = vunpack.c.l.b16 %v595
  %v1112 = vunpack.c.l.b16 %v596
  %v1113 = vunpack.c.l.b16 %v597
  %v1114 = vunpack.c.l.b16 %v598
  %v1115 = vunpack.c.l.b16 %v599
  %v1116 = vunpack.c.l.b16 %v600
  %v1117 = vunpack.c.l.b16 %v601
  %v1118 = vunpack.c.l.b16 %v602
  %v1119 = vunpack.c.l.b16 %v603
  %v1120 = vunpack.c.l.b16 %v604
  %v1121 = vunpack.c.l.b16 %v605
  %v1122 = vunpack.c.l.b16 %v606
  %v1123 = vunpack.c.l.b16 %v607
  %v1124 = vunpack.c.l.b16 %v608
  %v1125 = vunpack.c.l.b16 %v609
  %v1126 = vunpack.c.l.b16 %v610
  %v1127 = vunpack.c.l.b16 %v611
  %v1128 = vunpack.c.l.b16 %v612
  %v1129 = vunpack.c.l.b16 %v613
  %v1130 = vunpack.c.l.b16 %v614
  %v1131 = vunpack.c.l.b16 %v615
  %v1132 = vunpack.c.l.b16 %v616
  %v1133 = vunpack.c.l.b16 %v617
  %v1134 = vunpack.c.l.b16 %v618
  %v1135 = vunpack.c.l.b16 %v619
  %v1136 = vunpack.c.l.b16 %v620
  %v1137 = vunpack.c.l.b16 %v621
  %v1138 = vunpack.c.l.b16 %v622
  %v1139 = vunpack.c.l.b16 %v623
  %v1140 = vunpack.c.l.b16 %v624
  %v1141 = vunpack.c.l.b16 %v625
  %v1142 = vunpack.c.l.b16 %v626
  %v1143 = vunpack.c.l.b16 %v627
  %v1144 = vunpack.c.l.b16 %v628
  %v1145 = vunpack.c.l.b16 %v629
  %v1146 = vunpack.c.l.b16 %v630
  %v1147 = vunpack.c.l.b16 %v631
  %v1148 = vunpack.c.l.b16 %v632
  %v1149 = vunpack.c.l.b16 %v633
  %v1150 = vunpack.c.l.b16 %v634
  %v1151 = vunpack.c.l.b16 %v635
  %v1152 = vunpack.c.l.b16 %v636
  %v1153 = vunpack.c.l.b16 %v637
  %v1154 = vunpack.c.l.b16 %v638
  %v1155 = vunpack.c.l.b16 %v639
  %v1156 = vunpack.c.l.b16 %v640
  %v1157 = vunpack.c.l.b16 %v641
  %v1158 = vunpack.c.l.b16 %v642
  %v1159 = vunpack.c.l.b16 %v643
  %v1160 = vunpack.c.l.b16 %v644
  %v1161 = vunpack.c.l.b16 %v645
  %v1162 = vunpack.c.l.b16 %v646
  %v1163 = vunpack.c.l.b16 %v647
  %v1164 = vunpack.c.l.b16 %v648
  %v1165 = vunpack.c.l.b16 %v649
  %v1166 = vunpack.c.l.b16 %v650
  %v1167 = vunpack.c.l.b16 %v651
  %v1168 = vunpack.c.l.b16 %v652
  %v1169 = vunpack.c.l.b16 %v653
  %v1170 = vunpack.c.l.b16 %v654
  %v1171 = vunpack.c.l.b16 %v655
  %v1172 = vunpack.c.l.b16 %v656
  %v1173 = vunpack.c.l.b16 %v657
  %v1174 = vunpack.c.l.b16 %v658
  %v1175 = vunpack.c.l.b16 %v659
  %v1176 = vunpack.c.l.b16 %v660
  %v1177 = vunpack.c.l.b16 %v661
  %v1178 = vunpack.c.l.b16 %v662
  %v1179 = vunpack.c.l.b16 %v663
  %v1180 = vunpack.c.l.b16 %v664
  %v1181 = vunpack.c.l.b16 %v665
  %v1182 = vunpack.c.l.b16 %v666
  %v1183 = vunpack.c.l.b16 %v667
  %v1184 = vunpack.c.l.b16 %v668
  %v1185 = vunpack.c.l.b16 %v669
  %v1186 = vunpack.c.l.b16 %v670
  %v1187 = vunpack.c.l.b16 %v671
  %v1188 = vunpack.c.l.b16 %v672
  %v1189 = vunpack.c.l.b16 %v673
  %v1190 = vunpack.c.l.b16 %v674
  %v1191 = vunpack.c.l.b16 %v675
  %v1192 = vunpack.c.l.b16 %v676
  %v1193 = vunpack.c.l.b16 %v677
  %v1194 = vunpack.c.l.b16 %v678
  %v1195 = vunpack.c.l.b16 %v679
  %v1196 = vunpack.c.l.b16 %v680
  %v1197 = vunpack.c.l.b16 %v681
  %v1198 = vunpack.c.l.b16 %v682
  %v1199 = vunpack.c.l.b16 %v683
  %v1200 = vunpack.c.l.b16 %v684
  %v1201 = vunpack.c.l.b16 %v685
  %v1202 = vunpack.c.l.b16 %v686
  %v1203 = vunpack.c.l.b16 %v687
  %v1204 = vunpack.c.l.b16 %v688
  %v1205 = vunpack.c.l.b16 %v689
  %v1206 = vunpack.c.l.b16 %v690
  %v1207 = vunpack.c.l.b16 %v691
  %v1208 = vunpack.c.l.b16 %v692
  %v1209 = vunpack.c.l.b16 %v693
  %v1210 = vunpack.c.l.b16 %v694
  %v1211 = vunpack.c.l.b16 %v695
  %v1212 = vunpack.c.l.b16 %v696
  %v1213 = vunpack.c.l.b16 %v697
  %v1214 = vunpack.c.l.b16 %v698
  %v1215 = vunpack.c.l.b16 %v699
  %v1216 = vunpack.c.l.b16 %v700
  %v1217 = vunpack.c.l.b16 %v701
  %v1218 = vunpack.c.l.b16 %v702
  %v1219 = vunpack.c.l.b16 %v703
  %v1220 = vunpack.c.l.b16 %v704
  %v1221 = vunpack.c.l.b16 %v705
  %v1222 = vunpack.c.l.b16 %v706
  %v1223 = vunpack.c.l.b16 %v707
  %v1224 = vunpack.c.l.b16 %v708
  %v1225 = vunpack.c.l.b16 %v709
  %v1226 = vunpack.c.l.b16 %v710
  %v1227 = vunpack.c.l.b16 %v711
  %v1228 = vunpack.c.l.b16 %v712
  %v1229 = vunpack.c.l.b16 %v713
  %v1230 = vunpack.c.l.b16 %v714
  %v1231 = vunpack.c.l.b16 %v715
  %v1232 = vunpack.c.l.b16 %v716
  %v1233 = vunpack.c.l.b16 %v717
  %v1234 = vunpack.c.l.b16 %v718
  %v1235 = vpack.c.b16 %v980, %v979
  %v1236 = vpack.c.b16 %v982, %v981
  %v1237 = vpack.c.b16 %v984, %v983
  %v1238 = vpack.c.b16 %v986, %v985
  %v1239 = vpack.c.b16 %v988, %v987
  %v1240 = vpack.c.b16 %v990, %v989
  %v1241 = vpack.c.b16 %v992, %v991
  %v1242 = vpack.c.b16 %v994, %v993
  %v1243 = vpack.c.b16 %v996, %v995
  %v1244 = vpack.c.b16 %v998, %v997
  %v1245 = vpack.c.b16 %v1000, %v999
  %v1246 = vpack.c.b16 %v1002, %v1001
  %v1247 = vpack.c.b16 %v1004, %v1003
  %v1248 = vpack.c.b16 %v1006, %v1005
  %v1249 = vpack.c.b16 %v1008, %v1007
  %v1250 = vpack.c.b16 %v1010, %v1009
  %v1251 = vpack.c.b16 %v1012, %v1011
  %v1252 = vpack.c.b16 %v1014, %v1013
  %v1253 = vpack.c.b16 %v1016, %v1015
  %v1254 = vpack.c.b16 %v1018, %v1017
  %v1255 = vpack.c.b16 %v1020, %v1019
  %v1256 = vpack.c.b16 %v1022, %v1021
  %v1257 = vpack.c.b16 %v1024, %v1023
  %v1258 = vpack.c.b16 %v1026, %v1025
  %v1259 = vpack.c.b16 %v1028, %v1027
  %v1260 = vpack.c.b16 %v1030, %v1029
  %v1261 = vpack.c.b16 %v1032, %v1031
  %v1262 = vpack.c.b16 %v1034, %v1033
  %v1263 = vpack.c.b16 %v1036, %v1035
  %v1264 = vpack.c.b16 %v1038, %v1037
  %v1265 = vpack.c.b16 %v1040, %v1039
  %v1266 = vpack.c.b16 %v1042, %v1041
  %v1267 = vpack.c.b16 %v1044, %v1043
  %v1268 = vpack.c.b16 %v1046, %v1045
  %v1269 = vpack.c.b16 %v1048, %v1047
  %v1270 = vpack.c.b16 %v1050, %v1049
  %v1271 = vpack.c.b16 %v1052, %v1051
  %v1272 = vpack.c.b16 %v1054, %v1053
  %v1273 = vpack.c.b16 %v1056, %v1055
  %v1274 = vpack.c.b16 %v1058, %v1057
  %v1275 = vpack.c.b16 %v1060, %v1059
  %v1276 = vpack.c.b16 %v1062, %v1061
  %v1277 = vpack.c.b16 %v1064, %v1063
  %v1278 = vpack.c.b16 %v1066, %v1065
  %v1279 = vpack.c.b16 %v1068, %v1067
  %v1280 = vpack.c.b16 %v1070, %v1069
  %v1281 = vpack.c.b16 %v1072, %v1071
  %v1282 = vpack.c.b16 %v1074, %v1073
  %v1283 = vpack.c.b16 %v1076, %v1075
  %v1284 = vpack.c.b16 %v1078, %v1077
  %v1285 = vpack.c.b16 %v1080, %v1079
  %v1286 = vpack.c.b16 %v1082, %v1081
  %v1287 = vpack.c.b16 %v1084, %v1083
  %v1288 = vpack.c.b16 %v1086, %v1085
  %v1289 = vpack.c.b16 %v1088, %v1087
  %v1290 = vpack.c.b16 %v1090, %v1089
  %v1291 = vpack.c.b16 %v1092, %v1091
  %v1292 = vpack.c.b16 %v1094, %v1093
  %v1293 = vpack.c.b16 %v1096, %v1095
  %v1294 = vpack.c.b16 %v1098, %v1097
  %v1295 = vpack.c.b16 %v1100, %v1099
  %v1296 = vpack.c.b16 %v1102, %v1101
  %v1297 = vpack.c.b16 %v1104, %v1103
  %v1298 = vpack.c.b16 %v1106, %v1105
  %v1299 = vpack.c.b16 %v1108, %v1107
  %v1300 = vpack.c.b16 %v1110, %v1109
  %v1301 = vpack.c.b16 %v1112, %v1111
  %v1302 = vpack.c.b16 %v1114, %v1113
  %v1303 = vpack.c.b16 %v1116, %v1115
  %v1304 = vpack.c.b16 %v1118, %v1117
  %v1305 = vpack.c.b16 %v1120, %v1119
  %v1306 = vpack.c.b16 %v1122, %v1121
  %v1307 = vpack.c.b16 %v1124, %v1123
  %v1308 = vpack.c.b16 %v1126, %v1125
  %v1309 = vpack.c.b16 %v1128, %v1127
  %v1310 = vpack.c.b16 %v1130, %v1129
  %v1311 = vpack.c.b16 %v1132, %v1131
  %v1312 = vpack.c.b16 %v1134, %v1133
  %v1313 = vpack.c.b16 %v1136, %v1135
  %v1314 = vpack.c.b16 %v1138, %v1137
  %v1315 = vpack.c.b16 %v1140, %v1139
  %v1316 = vpack.c.b16 %v1142, %v1141
  %v1317 = vpack.c.b16 %v1144, %v1143
  %v1318 = vpack.c.b16 %v1146, %v1145
  %v1319 = vpack.c.b16 %v1148, %v1147
  %v1320 = vpack.c.b16 %v1150, %v1149
  %v1321 = vpack.c.b16 %v1152, %v1151
  %v1322 = vpack.c.b16 %v1154, %v1153
  %v1323 = vpack.c.b16 %v1156, %v1155
  %v1324 = vpack.c.b16 %v1158, %v1157
  %v1325 = vpack.c.b16 %v1160, %v1159
  %v1326 = vpack.c.b16 %v1162, %v1161
  %v1327 = vpack.c.b16 %v1164, %v1163
  %v1328 = vpack.c.b16 %v1166, %v1165
  %v1329 = vpack.c.b16 %v1168, %v1167
  %v1330 = vpack.c.b16 %v1170, %v1169
  %v1331 = vpack.c.b16 %v1172, %v1171
  %v1332 = vpack.c.b16 %v1174, %v1173
  %v1333 = vpack.c.b16 %v1176, %v1175
  %v1334 = vpack.c.b16 %v1178, %v1177
  %v1335 = vpack.c.b16 %v1180, %v1179
  %v1336 = vpack.c.b16 %v1182, %v1181
  %v1337 = vpack.c.b16 %v1184, %v1183
  %v1338 = vpack.c.b16 %v1186, %v1185
  %v1339 = vpack.c.b16 %v1188, %v1187
  %v1340 = vpack.c.b16 %v1190, %v1189
  %v1341 = vpack.c.b16 %v1192, %v1191
  %v1342 = vpack.c.b16 %v1194, %v1193
  %v1343 = vpack.c.b16 %v1196, %v1195
  %v1344 = vpack.c.b16 %v1198, %v1197
  %v1345 = vpack.c.b16 %v1200, %v1199
  %v1346 = vpack.c.b16 %v1202, %v1201
  %v1347 = vpack.c.b16 %v1204, %v1203
  %v1348 = vpack.c.b16 %v1206, %v1205
  %v1349 = vpack.c.b16 %v1208, %v1207
  %v1350 = vpack.c.b16 %v1210, %v1209
  %v1351 = vpack.c.b16 %v1212, %v1211
  %v1352 = vpack.c.b16 %v1214, %v1213
  %v1353 = vpack.c.b16 %v1216, %v1215
  %v1354 = vpack.c.b16 %v1218, %v1217
  %v1355 = vpack.c.b16 %v1220, %v1219
  %v1356 = vpack.c.b16 %v1222, %v1221
  %v1357 = vpack.c.b16 %v1224, %v1223
  %v1358 = vpack.c.b16 %v1226, %v1225
  %v1359 = vpack.c.b16 %v1228, %v1227
  %v1360 = vpack.c.b16 %v1230, %v1229
  %v1361 = vpack.c.b16 %v1232, %v1231
  %v1362 = vpack.c.b16 %v1234, %v1233
  %1491 = vmatpush.bf16.msra.mxu0 %v1242
  %1492 = vmatpush.bf16.msra.mxu0 %v1241
  %1493 = vmatpush.bf16.msra.mxu0 %v1240
  %1494 = vmatpush.bf16.msra.mxu0 %v1239
  %1495 = vmatpush.bf16.msra.mxu0 %v1238
  %1496 = vmatpush.bf16.msra.mxu0 %v1237
  %1497 = vmatpush.bf16.msra.mxu0 %v1236
  %1498 = vmatpush.bf16.msra.mxu0 %v1235
  %1499 = vmatmul.bf16.gmra.mxu0 %v447
  %v1500 = vpop.f32.mrf.mxu0
  %v1501 = vadd.f32 %v721, %v1500
  %v1502 = vpop.f32.mrf.mxu0
  %1503 = vdwg.mxu0
  %1504 = vmatpush.bf16.msra.mxu0 %v1250
  %1505 = vmatpush.bf16.msra.mxu0 %v1249
  %1506 = vmatpush.bf16.msra.mxu0 %v1248
  %1507 = vmatpush.bf16.msra.mxu0 %v1247
  %1508 = vmatpush.bf16.msra.mxu0 %v1246
  %1509 = vmatpush.bf16.msra.mxu0 %v1245
  %1510 = vmatpush.bf16.msra.mxu0 %v1244
  %1511 = vmatpush.bf16.msra.mxu0 %v1243
  %1512 = vmatmul.bf16.gmra.mxu0 %v448
  %v1513 = vpop.f32.mrf.mxu0
  %v1514 = vadd.f32 %v1501, %v1513
  %v1515 = vpop.f32.mrf.mxu0
  %1516 = vdwg.mxu0
  %1517 = vmatpush.bf16.msra.mxu0 %v1258
  %1518 = vmatpush.bf16.msra.mxu0 %v1257
  %1519 = vmatpush.bf16.msra.mxu0 %v1256
  %1520 = vmatpush.bf16.msra.mxu0 %v1255
  %1521 = vmatpush.bf16.msra.mxu0 %v1254
  %1522 = vmatpush.bf16.msra.mxu0 %v1253
  %1523 = vmatpush.bf16.msra.mxu0 %v1252
  %1524 = vmatpush.bf16.msra.mxu0 %v1251
  %1525 = vmatmul.bf16.gmra.mxu0 %v449
  %v1526 = vpop.f32.mrf.mxu0
  %v1527 = vadd.f32 %v1514, %v1526
  %v1528 = vpop.f32.mrf.mxu0
  %1529 = vdwg.mxu0
  %1530 = vmatpush.bf16.msra.mxu0 %v1266
  %1531 = vmatpush.bf16.msra.mxu0 %v1265
  %1532 = vmatpush.bf16.msra.mxu0 %v1264
  %1533 = vmatpush.bf16.msra.mxu0 %v1263
  %1534 = vmatpush.bf16.msra.mxu0 %v1262
  %1535 = vmatpush.bf16.msra.mxu0 %v1261
  %1536 = vmatpush.bf16.msra.mxu0 %v1260
  %1537 = vmatpush.bf16.msra.mxu0 %v1259
  %1538 = vmatmul.bf16.gmra.mxu0 %v450
  %v1539 = vpop.f32.mrf.mxu0
  %v1540 = vadd.f32 %v1527, %v1539
  %v1541 = vpop.f32.mrf.mxu0
  %1542 = vdwg.mxu0
  %1543 = vmatpush.bf16.msra.mxu0 %v1274
  %1544 = vmatpush.bf16.msra.mxu0 %v1273
  %1545 = vmatpush.bf16.msra.mxu0 %v1272
  %1546 = vmatpush.bf16.msra.mxu0 %v1271
  %1547 = vmatpush.bf16.msra.mxu0 %v1270
  %1548 = vmatpush.bf16.msra.mxu0 %v1269
  %1549 = vmatpush.bf16.msra.mxu0 %v1268
  %1550 = vmatpush.bf16.msra.mxu0 %v1267
  %1551 = vmatmul.bf16.gmra.mxu0 %v451
  %v1552 = vpop.f32.mrf.mxu0
  %v1553 = vadd.f32 %v1540, %v1552
  %v1554 = vpop.f32.mrf.mxu0
  %1555 = vdwg.mxu0
  %1556 = vmatpush.bf16.msra.mxu0 %v1282
  %1557 = vmatpush.bf16.msra.mxu0 %v1281
  %1558 = vmatpush.bf16.msra.mxu0 %v1280
  %1559 = vmatpush.bf16.msra.mxu0 %v1279
  %1560 = vmatpush.bf16.msra.mxu0 %v1278
  %1561 = vmatpush.bf16.msra.mxu0 %v1277
  %1562 = vmatpush.bf16.msra.mxu0 %v1276
  %1563 = vmatpush.bf16.msra.mxu0 %v1275
  %1564 = vmatmul.bf16.gmra.mxu0 %v452
  %v1565 = vpop.f32.mrf.mxu0
  %v1566 = vadd.f32 %v1553, %v1565
  %v1567 = vpop.f32.mrf.mxu0
  %1568 = vdwg.mxu0
  %1569 = vmatpush.bf16.msra.mxu0 %v1290
  %1570 = vmatpush.bf16.msra.mxu0 %v1289
  %1571 = vmatpush.bf16.msra.mxu0 %v1288
  %1572 = vmatpush.bf16.msra.mxu0 %v1287
  %1573 = vmatpush.bf16.msra.mxu0 %v1286
  %1574 = vmatpush.bf16.msra.mxu0 %v1285
  %1575 = vmatpush.bf16.msra.mxu0 %v1284
  %1576 = vmatpush.bf16.msra.mxu0 %v1283
  %1577 = vmatmul.bf16.gmra.mxu0 %v453
  %v1578 = vpop.f32.mrf.mxu0
  %v1579 = vadd.f32 %v1566, %v1578
  %v1580 = vpop.f32.mrf.mxu0
  %1581 = vdwg.mxu0
  %1582 = vmatpush.bf16.msra.mxu0 %v1298
  %1583 = vmatpush.bf16.msra.mxu0 %v1297
  %1584 = vmatpush.bf16.msra.mxu0 %v1296
  %1585 = vmatpush.bf16.msra.mxu0 %v1295
  %1586 = vmatpush.bf16.msra.mxu0 %v1294
  %1587 = vmatpush.bf16.msra.mxu0 %v1293
  %1588 = vmatpush.bf16.msra.mxu0 %v1292
  %1589 = vmatpush.bf16.msra.mxu0 %v1291
  %1590 = vmatmul.bf16.gmra.mxu0 %v454
  %v1591 = vpop.f32.mrf.mxu0
  %v1592 = vadd.f32 %v1579, %v1591
  %v1593 = vpop.f32.mrf.mxu0
  %1594 = vdwg.mxu0
  %1595 = vmatpush.bf16.msra.mxu0 %v1306
  %1596 = vmatpush.bf16.msra.mxu0 %v1305
  %1597 = vmatpush.bf16.msra.mxu0 %v1304
  %1598 = vmatpush.bf16.msra.mxu0 %v1303
  %1599 = vmatpush.bf16.msra.mxu0 %v1302
  %1600 = vmatpush.bf16.msra.mxu0 %v1301
  %1601 = vmatpush.bf16.msra.mxu0 %v1300
  %1602 = vmatpush.bf16.msra.mxu0 %v1299
  %1603 = vmatmul.bf16.gmra.mxu0 %v455
  %v1604 = vpop.f32.mrf.mxu0
  %v1605 = vadd.f32 %v1592, %v1604
  %v1606 = vpop.f32.mrf.mxu0
  %1607 = vdwg.mxu0
  %1608 = vmatpush.bf16.msra.mxu0 %v1314
  %1609 = vmatpush.bf16.msra.mxu0 %v1313
  %1610 = vmatpush.bf16.msra.mxu0 %v1312
  %1611 = vmatpush.bf16.msra.mxu0 %v1311
  %1612 = vmatpush.bf16.msra.mxu0 %v1310
  %1613 = vmatpush.bf16.msra.mxu0 %v1309
  %1614 = vmatpush.bf16.msra.mxu0 %v1308
  %1615 = vmatpush.bf16.msra.mxu0 %v1307
  %1616 = vmatmul.bf16.gmra.mxu0 %v456
  %v1617 = vpop.f32.mrf.mxu0
  %v1618 = vadd.f32 %v1605, %v1617
  %v1619 = vpop.f32.mrf.mxu0
  %1620 = vdwg.mxu0
  %1621 = vmatpush.bf16.msra.mxu0 %v1322
  %1622 = vmatpush.bf16.msra.mxu0 %v1321
  %1623 = vmatpush.bf16.msra.mxu0 %v1320
  %1624 = vmatpush.bf16.msra.mxu0 %v1319
  %1625 = vmatpush.bf16.msra.mxu0 %v1318
  %1626 = vmatpush.bf16.msra.mxu0 %v1317
  %1627 = vmatpush.bf16.msra.mxu0 %v1316
  %1628 = vmatpush.bf16.msra.mxu0 %v1315
  %1629 = vmatmul.bf16.gmra.mxu0 %v457
  %v1630 = vpop.f32.mrf.mxu0
  %v1631 = vadd.f32 %v1618, %v1630
  %v1632 = vpop.f32.mrf.mxu0
  %1633 = vdwg.mxu0
  %1634 = vmatpush.bf16.msra.mxu0 %v1330
  %1635 = vmatpush.bf16.msra.mxu0 %v1329
  %1636 = vmatpush.bf16.msra.mxu0 %v1328
  %1637 = vmatpush.bf16.msra.mxu0 %v1327
  %1638 = vmatpush.bf16.msra.mxu0 %v1326
  %1639 = vmatpush.bf16.msra.mxu0 %v1325
  %1640 = vmatpush.bf16.msra.mxu0 %v1324
  %1641 = vmatpush.bf16.msra.mxu0 %v1323
  %1642 = vmatmul.bf16.gmra.mxu0 %v458
  %v1643 = vpop.f32.mrf.mxu0
  %v1644 = vadd.f32 %v1631, %v1643
  %v1645 = vpop.f32.mrf.mxu0
  %1646 = vdwg.mxu0
  %1647 = vmatpush.bf16.msra.mxu0 %v1338
  %1648 = vmatpush.bf16.msra.mxu0 %v1337
  %1649 = vmatpush.bf16.msra.mxu0 %v1336
  %1650 = vmatpush.bf16.msra.mxu0 %v1335
  %1651 = vmatpush.bf16.msra.mxu0 %v1334
  %1652 = vmatpush.bf16.msra.mxu0 %v1333
  %1653 = vmatpush.bf16.msra.mxu0 %v1332
  %1654 = vmatpush.bf16.msra.mxu0 %v1331
  %1655 = vmatmul.bf16.gmra.mxu0 %v459
  %v1656 = vpop.f32.mrf.mxu0
  %v1657 = vadd.f32 %v1644, %v1656
  %v1658 = vpop.f32.mrf.mxu0
  %1659 = vdwg.mxu0
  %1660 = vmatpush.bf16.msra.mxu0 %v1346
  %1661 = vmatpush.bf16.msra.mxu0 %v1345
  %1662 = vmatpush.bf16.msra.mxu0 %v1344
  %1663 = vmatpush.bf16.msra.mxu0 %v1343
  %1664 = vmatpush.bf16.msra.mxu0 %v1342
  %1665 = vmatpush.bf16.msra.mxu0 %v1341
  %1666 = vmatpush.bf16.msra.mxu0 %v1340
  %1667 = vmatpush.bf16.msra.mxu0 %v1339
  %1668 = vmatmul.bf16.gmra.mxu0 %v460
  %v1669 = vpop.f32.mrf.mxu0
  %v1670 = vadd.f32 %v1657, %v1669
  %v1671 = vpop.f32.mrf.mxu0
  %1672 = vdwg.mxu0
  %1673 = vmatpush.bf16.msra.mxu0 %v1354
  %1674 = vmatpush.bf16.msra.mxu0 %v1353
  %1675 = vmatpush.bf16.msra.mxu0 %v1352
  %1676 = vmatpush.bf16.msra.mxu0 %v1351
  %1677 = vmatpush.bf16.msra.mxu0 %v1350
  %1678 = vmatpush.bf16.msra.mxu0 %v1349
  %1679 = vmatpush.bf16.msra.mxu0 %v1348
  %1680 = vmatpush.bf16.msra.mxu0 %v1347
  %1681 = vmatmul.bf16.gmra.mxu0 %v461
  %v1682 = vpop.f32.mrf.mxu0
  %v1683 = vadd.f32 %v1670, %v1682
  %v1684 = vpop.f32.mrf.mxu0
  %1685 = vdwg.mxu0
  %1686 = vmatpush.bf16.msra.mxu0 %v1362
  %1687 = vmatpush.bf16.msra.mxu0 %v1361
  %1688 = vmatpush.bf16.msra.mxu0 %v1360
  %1689 = vmatpush.bf16.msra.mxu0 %v1359
  %1690 = vmatpush.bf16.msra.mxu0 %v1358
  %1691 = vmatpush.bf16.msra.mxu0 %v1357
  %1692 = vmatpush.bf16.msra.mxu0 %v1356
  %1693 = vmatpush.bf16.msra.mxu0 %v1355
  %1694 = vmatmul.bf16.gmra.mxu0 %v462
  %v1695 = vpop.f32.mrf.mxu0
  %v1696 = vadd.f32 %v1683, %v1695
  %v1697 = vpop.f32.mrf.mxu0
  %1698 = vdwg.mxu0
  %1699 = vst [vmem:[%s4] sm:$0xff] %v1696
  // Predicated region
  $region18: #{our_model_forward.6} parent=0 // pred_check
    _
  $region19: #{our_model_forward.6} parent=0 // pred_check_branch
    %1701 = sbr.rel (0) target = $region21
  $region20: #{our_model_forward.6} parent=0 // pred_region
    _
  $region21: #{our_model_forward.6} parent=0 // pred_fallthru
    _
  // Predicated region
  $region22: #{our_model_forward.6} parent=0 // pred_check
    _
  $region23: #{our_model_forward.6} parent=0 // pred_check_branch
    %1703 = sbr.rel (0) target = $region25
  $region24: #{our_model_forward.6} parent=0 // pred_region
    _
  $region25: #{our_model_forward.6} parent=0 // pred_fallthru
    _

</llo_original>
